<compile_context>
chip_gen: v7x
topology: tpu7x:2x2x1
jax: 0.10.0
libtpu: 0.0.40
codegen_flags: <defaults>
</compile_context>

<pallas_src>
import math

import jax
import jax.numpy as jnp
from jax.experimental import pallas as pl
from jax.experimental.pallas import tpu as pltpu

# --- module hyper-parameters (small, consistent with the PyTorch __init__) -------------
NUM_FEATURES = 8        # num_features
HIDDEN = 32             # hidden_size (n_embd), n_head=4 -> head_dim=8
NUM_INSTANCES = 4       # num_instances
BATCH = 2
NUM_LAYERS = 4          # GPT2Config(n_layer=4)
N_INNER = 4 * HIDDEN    # GPT2Config(n_inner=hidden*4) = 128
LN_EPS = 1e-5           # GPT2 layer_norm_epsilon
LANE = 128              # TPU lane width

# --- packed-slab row/col layout ---------------------------------------------------------
# Weight slab W: (W_ROWS, 128) f32
R_WIN = 0                                   # rows 0:8    cols 0:32   -> w_in (F, H)
R_WATT = R_WIN + NUM_FEATURES               # rows 8:40   layer l at cols 32l:32(l+1)
R_WFC = R_WATT + HIDDEN                     # rows 40:168 layer l at rows R_WFC+32l, all 128 cols
R_WMP = R_WFC + NUM_LAYERS * HIDDEN         # rows 168:296 layer l at cols 32l:32(l+1)
R_WOUT = R_WMP + N_INNER                    # rows 296:328 (H, 128) — only cols 0:F nonzero
W_ROWS = R_WOUT + HIDDEN                    # 328 (multiple of 8)

# Bias slab B: (B_ROWS, 128) f32 — one row per bias vector
B_IN = 0                                    # b_in + wpe0            cols 0:32
B_ATT = 1                                   # rows 1..4  fused attn  cols 0:32
B_FC = B_ATT + NUM_LAYERS                   # rows 5..8  mlp fc      cols 0:128
B_MP = B_FC + NUM_LAYERS                    # rows 9..12 mlp proj    cols 0:32
B_OUT = B_MP + NUM_LAYERS                   # row 13     output      cols 0:8 (rest zero)
B_ROWS = 16                                 # padded to multiple of 8


def _gelu_new(x):
    # GPT2 "gelu_new" activation (kept in f32 on the VPU/EUP)
    return 0.5 * x * (1.0 + jnp.tanh(math.sqrt(2.0 / math.pi) * (x + 0.044715 * x ** 3)))


def _normalize(x):
    # LayerNorm with the affine part already folded into downstream weights.
    mu = jnp.mean(x, axis=-1, keepdims=True)
    var = jnp.mean((x - mu) ** 2, axis=-1, keepdims=True)
    return (x - mu) * jax.lax.rsqrt(var + LN_EPS)


def _layer_norm(x, g, b):
    return _normalize(x) * g + b


# ----------------------------- Pallas kernel -------------------------------------------
def superposition_kernel(x_ref, w_ref, b_ref, o_ref):
    f32 = jnp.float32
    H, F = HIDDEN, NUM_FEATURES

    x = x_ref[...]                                                           # (tn, F)
    # input_projection with (b_in + wpe[0]) folded into one bias row
    h = jnp.dot(x, w_ref[R_WIN:R_WIN + F, 0:H], preferred_element_type=f32)
    h = h + b_ref[B_IN:B_IN + 1, 0:H]

    for l in range(NUM_LAYERS):
        # --- attention block: seq_len == 1 -> softmax == 1 -> purely affine.
        #     LN1 affine + (W_v @ W_proj) fused into a single (H,H) matmul.
        hn = _normalize(h)
        att = jnp.dot(hn, w_ref[R_WATT:R_WATT + H, H * l:H * (l + 1)],
                      preferred_element_type=f32)
        h = h + att + b_ref[B_ATT + l:B_ATT + l + 1, 0:H]

        # --- MLP block: LN2 affine folded into w_fc / b_fc.
        hn2 = _normalize(h)
        ff = jnp.dot(hn2, w_ref[R_WFC + H * l:R_WFC + H * (l + 1), :],
                     preferred_element_type=f32) + b_ref[B_FC + l:B_FC + l + 1, :]
        ff = _gelu_new(ff)
        mp = jnp.dot(ff, w_ref[R_WMP:R_WMP + N_INNER, H * l:H * (l + 1)],
                     preferred_element_type=f32)
        h = h + mp + b_ref[B_MP + l:B_MP + l + 1, 0:H]

    # final LN (affine folded into w_out/b_out) + output projection, lane-dense output
    hf = _normalize(h)
    out = jnp.dot(hf, w_ref[R_WOUT:R_WOUT + H, :],
                  preferred_element_type=f32) + b_ref[B_OUT:B_OUT + 1, :]
    o_ref[...] = jnp.maximum(out, 0.0)                                       # F.relu


# ----------------------------- parameter packing (algebraic fusion) ---------------------
def pack_params(p):
    """Fuse attention matmuls, fold LN affines + positional bias, pack into 2 slabs."""
    H, F, NI = HIDDEN, NUM_FEATURES, N_INNER
    W = jnp.zeros((W_ROWS, LANE), jnp.float32)
    B = jnp.zeros((B_ROWS, LANE), jnp.float32)

    W = W.at[R_WIN:R_WIN + F, 0:H].set(p["w_in"])
    B = B.at[B_IN, 0:H].set((p["b_in"] + p["wpe0"])[0])

    for l in range(NUM_LAYERS):
        # fuse V-projection and attention output projection (softmax == 1 for seq_len 1)
        w_va = p["w_v"][l] @ p["w_ap"][l]                      # (H, H)
        b_va = p["b_v"][l] @ p["w_ap"][l] + p["b_ap"][l]       # (1, H)
        # fold LN1 affine into the fused attention weight/bias
        w_att = p["ln1_g"][l].T * w_va
        b_att = p["ln1_b"][l] @ w_va + b_va
        W = W.at[R_WATT:R_WATT + H, H * l:H * (l + 1)].set(w_att)
        B = B.at[B_ATT + l, 0:H].set(b_att[0])

        # fold LN2 affine into the MLP input projection
        w_fc = p["ln2_g"][l].T * p["w_fc"][l]                  # (H, NI)
        b_fc = p["ln2_b"][l] @ p["w_fc"][l] + p["b_fc"][l]     # (1, NI)
        W = W.at[R_WFC + H * l:R_WFC + H * (l + 1), 0:NI].set(w_fc)
        B = B.at[B_FC + l, 0:NI].set(b_fc[0])

        W = W.at[R_WMP:R_WMP + NI, H * l:H * (l + 1)].set(p["w_mp"][l])
        B = B.at[B_MP + l, 0:H].set(p["b_mp"][l, 0])

    # fold final LN affine into the output projection
    w_out = p["lnf_g"].T * p["w_out"]                          # (H, F)
    b_out = p["lnf_b"] @ p["w_out"] + p["b_out"]               # (1, F)
    W = W.at[R_WOUT:R_WOUT + H, 0:F].set(w_out)
    B = B.at[B_OUT, 0:F].set(b_out[0])
    return W, B


# ----------------------------- wrapper --------------------------------------------------
def superposition_forward(features, params):
    """features: (batch, num_instances, num_features) float32 -> same shape, relu'd output."""
    b, ninst, f = features.shape
    x = features.reshape(b * ninst, f).astype(jnp.float32)
    n = x.shape[0]
    # Row tile: full array at toy sizes; 256-row tiles for larger workloads
    # (keeps weight slabs resident, pipelines activations, splits across TCs on v7x).
    tn = n if n <= 256 else 256
    assert n % tn == 0, "batch*num_instances must be a multiple of the row tile"

    w_slab, b_slab = pack_params(params)

    out_pad = pl.pallas_call(
        superposition_kernel,
        out_shape=jax.ShapeDtypeStruct((n, LANE), jnp.float32),
        grid=(n // tn,),
        in_specs=[
            pl.BlockSpec((tn, f), lambda i: (i, 0)),
            pl.BlockSpec((W_ROWS, LANE), lambda i: (0, 0)),
            pl.BlockSpec((B_ROWS, LANE), lambda i: (0, 0)),
        ],
        out_specs=pl.BlockSpec((tn, LANE), lambda i: (i, 0)),
        compiler_params=pltpu.CompilerParams(dimension_semantics=("parallel",)),
    )(x, w_slab, b_slab)

    # lane-dense kernel output -> slice back to (n, F)
    return out_pad[:, :f].reshape(b, ninst, f)


# ----------------------------- deterministic parameter init -----------------------------
def init_params(key):
    std = 0.02  # GPT2 initializer_range
    ks = jax.random.split(key, 16)
    p = {}
    p["w_in"] = std * jax.random.normal(ks[0], (NUM_FEATURES, HIDDEN), jnp.float32)
    p["b_in"] = std * jax.random.normal(ks[1], (1, HIDDEN), jnp.float32)
    p["wpe0"] = std * jax.random.normal(ks[2], (1, HIDDEN), jnp.float32)

    p["ln1_g"] = jnp.ones((NUM_LAYERS, 1, HIDDEN), jnp.float32)
    p["ln1_b"] = jnp.zeros((NUM_LAYERS, 1, HIDDEN), jnp.float32)
    # full c_attn is (H, 3H); with seq_len==1 only the V slice [2H:3H] affects the output
    w_attn = std * jax.random.normal(ks[3], (NUM_LAYERS, HIDDEN, 3 * HIDDEN), jnp.float32)
    b_attn = std * jax.random.normal(ks[4], (NUM_LAYERS, 1, 3 * HIDDEN), jnp.float32)
    p["w_v"] = w_attn[:, :, 2 * HIDDEN:]
    p["b_v"] = b_attn[:, :, 2 * HIDDEN:]
    p["w_ap"] = std * jax.random.normal(ks[5], (NUM_LAYERS, HIDDEN, HIDDEN), jnp.float32)
    p["b_ap"] = std * jax.random.normal(ks[6], (NUM_LAYERS, 1, HIDDEN), jnp.float32)

    p["ln2_g"] = jnp.ones((NUM_LAYERS, 1, HIDDEN), jnp.float32)
    p["ln2_b"] = jnp.zeros((NUM_LAYERS, 1, HIDDEN), jnp.float32)
    p["w_fc"] = std * jax.random.normal(ks[7], (NUM_LAYERS, HIDDEN, N_INNER), jnp.float32)
    p["b_fc"] = std * jax.random.normal(ks[8], (NUM_LAYERS, 1, N_INNER), jnp.float32)
    p["w_mp"] = std * jax.random.normal(ks[9], (NUM_LAYERS, N_INNER, HIDDEN), jnp.float32)
    p["b_mp"] = std * jax.random.normal(ks[10], (NUM_LAYERS, 1, HIDDEN), jnp.float32)

    p["lnf_g"] = jnp.ones((1, HIDDEN), jnp.float32)
    p["lnf_b"] = jnp.zeros((1, HIDDEN), jnp.float32)
    p["w_out"] = std * jax.random.normal(ks[11], (HIDDEN, NUM_FEATURES), jnp.float32)
    p["b_out"] = std * jax.random.normal(ks[12], (1, NUM_FEATURES), jnp.float32)
    return p
    # NOTE: if real PyTorch weights are loaded, nn.Linear / GPT2 Conv1D store (out,in) vs
    # (in,out) respectively — transpose nn.Linear weights in the wrapper before packing.


# ----------------------------- pure-JAX reference (unfused, for sanity check) -----------
def reference_forward(features, p):
    b, ninst, f = features.shape
    h = features.reshape(b * ninst, f) @ p["w_in"] + p["b_in"] + p["wpe0"]
    for l in range(NUM_LAYERS):
        hn = _layer_norm(h, p["ln1_g"][l], p["ln1_b"][l])
        v = hn @ p["w_v"][l] + p["b_v"][l]
        h = h + (v @ p["w_ap"][l] + p["b_ap"][l])
        hn2 = _layer_norm(h, p["ln2_g"][l], p["ln2_b"][l])
        ff = _gelu_new(hn2 @ p["w_fc"][l] + p["b_fc"][l])
        h = h + (ff @ p["w_mp"][l] + p["b_mp"][l])
    h = _layer_norm(h, p["lnf_g"], p["lnf_b"])
    out = h @ p["w_out"] + p["b_out"]
    return jnp.maximum(out, 0.0).reshape(b, ninst, f)


if __name__ == "__main__":
    key = jax.random.PRNGKey(0)
    k_feat, k_mask, k_params = jax.random.split(key, 3)

    params = init_params(k_params)

    # generate_data-style sparse features: Uniform[0,1) masked by feature_probability
    feature_probability = (20.0 ** (-jnp.linspace(0.0, 1.0, NUM_INSTANCES)))[:, None]   # (I, 1)
    raw = jax.random.uniform(k_feat, (BATCH, NUM_INSTANCES, NUM_FEATURES), jnp.float32)
    gate = jax.random.uniform(k_mask, (BATCH, NUM_INSTANCES, NUM_FEATURES), jnp.float32)
    features = jnp.where(gate <= feature_probability[None, :, :], raw, 0.0)

    out = superposition_forward(features, params)
    out = jax.block_until_ready(out)

    ref = reference_forward(features, params)
    assert out.shape == (BATCH, NUM_INSTANCES, NUM_FEATURES)
    assert jnp.allclose(out, ref, rtol=1e-5, atol=1e-5), "mismatch vs pure-JAX reference"

    print("KERNEL_OK")
</pallas_src>

<mosaic_0001>
module attributes {stable_mosaic.version = 11 : i64} {
  func.func @superposition_kernel(%arg0: i32, %arg1: memref<8x8xf32, #tpu.memory_space<vmem>>, %arg2: memref<328x128xf32, #tpu.memory_space<vmem>>, %arg3: memref<16x128xf32, #tpu.memory_space<vmem>>, %arg4: memref<8x128xf32, #tpu.memory_space<vmem>>) attributes {dimension_semantics = [#tpu.dimension_semantics<parallel>], iteration_bounds = array<i64: 1>, scalar_prefetch = 0 : i64, scratch_operands = 0 : i64, tpu.core_type = #tpu.core_type<tc>, window_params = [{transform_indices = @transform_0, window_bounds = array<i64: 8, 8>}, {pipeline_mode = #tpu.pipeline_mode<synchronous>, transform_indices = @transform_1, window_bounds = array<i64: 328, 128>}, {pipeline_mode = #tpu.pipeline_mode<synchronous>, transform_indices = @transform_2, window_bounds = array<i64: 16, 128>}, {transform_indices = @transform_3, window_bounds = array<i64: 8, 128>}]} {
    %c0 = arith.constant 0 : index
    %c0_0 = arith.constant 0 : index
    %0 = vector.load %arg1[%c0, %c0_0] : memref<8x8xf32, #tpu.memory_space<vmem>>, vector<8x8xf32>
    %c0_1 = arith.constant 0 : index
    %c0_2 = arith.constant 0 : index
    %1 = vector.load %arg2[%c0_1, %c0_2] : memref<328x128xf32, #tpu.memory_space<vmem>>, vector<8x32xf32>
    %cst = arith.constant dense<0.000000e+00> : vector<8x32xf32>
    %2 = tpu.matmul %0, %1, %cst {dimension_numbers = #tpu.dot_dimension_numbers<[1], [0], [0], [1], [0, 0, 1, 1], [], []>} : vector<8x8xf32>, vector<8x32xf32>, vector<8x32xf32> -> vector<8x32xf32>
    %c0_3 = arith.constant 0 : index
    %c0_4 = arith.constant 0 : index
    %3 = vector.load %arg3[%c0_3, %c0_4] : memref<16x128xf32, #tpu.memory_space<vmem>>, vector<1x32xf32>
    %4 = vector.broadcast %3 : vector<1x32xf32> to vector<8x32xf32>
    %5 = arith.addf %2, %4 : vector<8x32xf32>
    %cst_5 = arith.constant dense<0.000000e+00> : vector<8xf32>
    %6 = vector.multi_reduction <add>, %5, %cst_5 [1] : vector<8x32xf32> to vector<8xf32>
    %7 = vector.shape_cast %6 : vector<8xf32> to vector<8x1xf32>
    %cst_6 = arith.constant 3.200000e+01 : f32
    %8 = vector.broadcast %cst_6 : f32 to vector<8x1xf32>
    %9 = arith.divf %7, %8 : vector<8x1xf32>
    %10 = vector.broadcast %9 : vector<8x1xf32> to vector<8x32xf32>
    %11 = arith.subf %5, %10 : vector<8x32xf32>
    %12 = arith.mulf %11, %11 : vector<8x32xf32>
    %cst_7 = arith.constant dense<0.000000e+00> : vector<8xf32>
    %13 = vector.multi_reduction <add>, %12, %cst_7 [1] : vector<8x32xf32> to vector<8xf32>
    %14 = vector.shape_cast %13 : vector<8xf32> to vector<8x1xf32>
    %cst_8 = arith.constant 3.200000e+01 : f32
    %15 = vector.broadcast %cst_8 : f32 to vector<8x1xf32>
    %16 = arith.divf %14, %15 : vector<8x1xf32>
    %17 = vector.broadcast %9 : vector<8x1xf32> to vector<8x32xf32>
    %18 = arith.subf %5, %17 : vector<8x32xf32>
    %cst_9 = arith.constant 9.99999974E-6 : f32
    %19 = vector.broadcast %cst_9 : f32 to vector<8x1xf32>
    %20 = arith.addf %16, %19 : vector<8x1xf32>
    %21 = math.rsqrt %20 : vector<8x1xf32>
    %22 = vector.broadcast %21 : vector<8x1xf32> to vector<8x32xf32>
    %23 = arith.mulf %18, %22 : vector<8x32xf32>
    %c8 = arith.constant 8 : index
    %c0_10 = arith.constant 0 : index
    %24 = vector.load %arg2[%c8, %c0_10] : memref<328x128xf32, #tpu.memory_space<vmem>>, vector<32x32xf32>
    %cst_11 = arith.constant dense<0.000000e+00> : vector<8x32xf32>
    %25 = tpu.matmul %23, %24, %cst_11 {dimension_numbers = #tpu.dot_dimension_numbers<[1], [0], [0], [1], [0, 0, 1, 1], [], []>} : vector<8x32xf32>, vector<32x32xf32>, vector<8x32xf32> -> vector<8x32xf32>
    %26 = arith.addf %5, %25 : vector<8x32xf32>
    %c1 = arith.constant 1 : index
    %c0_12 = arith.constant 0 : index
    %27 = vector.load %arg3[%c1, %c0_12] : memref<16x128xf32, #tpu.memory_space<vmem>>, vector<1x32xf32>
    %28 = vector.broadcast %27 : vector<1x32xf32> to vector<8x32xf32>
    %29 = arith.addf %26, %28 : vector<8x32xf32>
    %cst_13 = arith.constant dense<0.000000e+00> : vector<8xf32>
    %30 = vector.multi_reduction <add>, %29, %cst_13 [1] : vector<8x32xf32> to vector<8xf32>
    %31 = vector.shape_cast %30 : vector<8xf32> to vector<8x1xf32>
    %cst_14 = arith.constant 3.200000e+01 : f32
    %32 = vector.broadcast %cst_14 : f32 to vector<8x1xf32>
    %33 = arith.divf %31, %32 : vector<8x1xf32>
    %34 = vector.broadcast %33 : vector<8x1xf32> to vector<8x32xf32>
    %35 = arith.subf %29, %34 : vector<8x32xf32>
    %36 = arith.mulf %35, %35 : vector<8x32xf32>
    %cst_15 = arith.constant dense<0.000000e+00> : vector<8xf32>
    %37 = vector.multi_reduction <add>, %36, %cst_15 [1] : vector<8x32xf32> to vector<8xf32>
    %38 = vector.shape_cast %37 : vector<8xf32> to vector<8x1xf32>
    %cst_16 = arith.constant 3.200000e+01 : f32
    %39 = vector.broadcast %cst_16 : f32 to vector<8x1xf32>
    %40 = arith.divf %38, %39 : vector<8x1xf32>
    %41 = vector.broadcast %33 : vector<8x1xf32> to vector<8x32xf32>
    %42 = arith.subf %29, %41 : vector<8x32xf32>
    %cst_17 = arith.constant 9.99999974E-6 : f32
    %43 = vector.broadcast %cst_17 : f32 to vector<8x1xf32>
    %44 = arith.addf %40, %43 : vector<8x1xf32>
    %45 = math.rsqrt %44 : vector<8x1xf32>
    %46 = vector.broadcast %45 : vector<8x1xf32> to vector<8x32xf32>
    %47 = arith.mulf %42, %46 : vector<8x32xf32>
    %c40 = arith.constant 40 : index
    %c0_18 = arith.constant 0 : index
    %48 = vector.load %arg2[%c40, %c0_18] : memref<328x128xf32, #tpu.memory_space<vmem>>, vector<32x128xf32>
    %cst_19 = arith.constant dense<0.000000e+00> : vector<8x128xf32>
    %49 = tpu.matmul %47, %48, %cst_19 {dimension_numbers = #tpu.dot_dimension_numbers<[1], [0], [0], [1], [0, 0, 1, 1], [], []>} : vector<8x32xf32>, vector<32x128xf32>, vector<8x128xf32> -> vector<8x128xf32>
    %c5 = arith.constant 5 : index
    %c0_20 = arith.constant 0 : index
    %50 = vector.load %arg3[%c5, %c0_20] : memref<16x128xf32, #tpu.memory_space<vmem>>, vector<1x128xf32>
    %51 = vector.broadcast %50 : vector<1x128xf32> to vector<8x128xf32>
    %52 = arith.addf %49, %51 : vector<8x128xf32>
    %cst_21 = arith.constant 5.000000e-01 : f32
    %53 = vector.broadcast %cst_21 : f32 to vector<8x128xf32>
    %54 = arith.mulf %53, %52 : vector<8x128xf32>
    %55 = arith.mulf %52, %52 : vector<8x128xf32>
    %56 = arith.mulf %52, %55 : vector<8x128xf32>
    %cst_22 = arith.constant 4.471500e-02 : f32
    %57 = vector.broadcast %cst_22 : f32 to vector<8x128xf32>
    %58 = arith.mulf %57, %56 : vector<8x128xf32>
    %59 = arith.addf %52, %58 : vector<8x128xf32>
    %cst_23 = arith.constant 0.797884583 : f32
    %60 = vector.broadcast %cst_23 : f32 to vector<8x128xf32>
    %61 = arith.mulf %60, %59 : vector<8x128xf32>
    %62 = math.tanh %61 : vector<8x128xf32>
    %cst_24 = arith.constant 1.000000e+00 : f32
    %63 = vector.broadcast %cst_24 : f32 to vector<8x128xf32>
    %64 = arith.addf %63, %62 : vector<8x128xf32>
    %65 = arith.mulf %54, %64 : vector<8x128xf32>
    %c168 = arith.constant 168 : index
    %c0_25 = arith.constant 0 : index
    %66 = vector.load %arg2[%c168, %c0_25] : memref<328x128xf32, #tpu.memory_space<vmem>>, vector<128x32xf32>
    %cst_26 = arith.constant dense<0.000000e+00> : vector<8x32xf32>
    %67 = tpu.matmul %65, %66, %cst_26 {dimension_numbers = #tpu.dot_dimension_numbers<[1], [0], [0], [1], [0, 0, 1, 1], [], []>} : vector<8x128xf32>, vector<128x32xf32>, vector<8x32xf32> -> vector<8x32xf32>
    %68 = arith.addf %29, %67 : vector<8x32xf32>
    %c9 = arith.constant 9 : index
    %c0_27 = arith.constant 0 : index
    %69 = vector.load %arg3[%c9, %c0_27] : memref<16x128xf32, #tpu.memory_space<vmem>>, vector<1x32xf32>
    %70 = vector.broadcast %69 : vector<1x32xf32> to vector<8x32xf32>
    %71 = arith.addf %68, %70 : vector<8x32xf32>
    %cst_28 = arith.constant dense<0.000000e+00> : vector<8xf32>
    %72 = vector.multi_reduction <add>, %71, %cst_28 [1] : vector<8x32xf32> to vector<8xf32>
    %73 = vector.shape_cast %72 : vector<8xf32> to vector<8x1xf32>
    %cst_29 = arith.constant 3.200000e+01 : f32
    %74 = vector.broadcast %cst_29 : f32 to vector<8x1xf32>
    %75 = arith.divf %73, %74 : vector<8x1xf32>
    %76 = vector.broadcast %75 : vector<8x1xf32> to vector<8x32xf32>
    %77 = arith.subf %71, %76 : vector<8x32xf32>
    %78 = arith.mulf %77, %77 : vector<8x32xf32>
    %cst_30 = arith.constant dense<0.000000e+00> : vector<8xf32>
    %79 = vector.multi_reduction <add>, %78, %cst_30 [1] : vector<8x32xf32> to vector<8xf32>
    %80 = vector.shape_cast %79 : vector<8xf32> to vector<8x1xf32>
    %cst_31 = arith.constant 3.200000e+01 : f32
    %81 = vector.broadcast %cst_31 : f32 to vector<8x1xf32>
    %82 = arith.divf %80, %81 : vector<8x1xf32>
    %83 = vector.broadcast %75 : vector<8x1xf32> to vector<8x32xf32>
    %84 = arith.subf %71, %83 : vector<8x32xf32>
    %cst_32 = arith.constant 9.99999974E-6 : f32
    %85 = vector.broadcast %cst_32 : f32 to vector<8x1xf32>
    %86 = arith.addf %82, %85 : vector<8x1xf32>
    %87 = math.rsqrt %86 : vector<8x1xf32>
    %88 = vector.broadcast %87 : vector<8x1xf32> to vector<8x32xf32>
    %89 = arith.mulf %84, %88 : vector<8x32xf32>
    %c8_33 = arith.constant 8 : index
    %c32 = arith.constant 32 : index
    %90 = vector.load %arg2[%c8_33, %c32] : memref<328x128xf32, #tpu.memory_space<vmem>>, vector<32x32xf32>
    %cst_34 = arith.constant dense<0.000000e+00> : vector<8x32xf32>
    %91 = tpu.matmul %89, %90, %cst_34 {dimension_numbers = #tpu.dot_dimension_numbers<[1], [0], [0], [1], [0, 0, 1, 1], [], []>} : vector<8x32xf32>, vector<32x32xf32>, vector<8x32xf32> -> vector<8x32xf32>
    %92 = arith.addf %71, %91 : vector<8x32xf32>
    %c2 = arith.constant 2 : index
    %c0_35 = arith.constant 0 : index
    %93 = vector.load %arg3[%c2, %c0_35] : memref<16x128xf32, #tpu.memory_space<vmem>>, vector<1x32xf32>
    %94 = vector.broadcast %93 : vector<1x32xf32> to vector<8x32xf32>
    %95 = arith.addf %92, %94 : vector<8x32xf32>
    %cst_36 = arith.constant dense<0.000000e+00> : vector<8xf32>
    %96 = vector.multi_reduction <add>, %95, %cst_36 [1] : vector<8x32xf32> to vector<8xf32>
    %97 = vector.shape_cast %96 : vector<8xf32> to vector<8x1xf32>
    %cst_37 = arith.constant 3.200000e+01 : f32
    %98 = vector.broadcast %cst_37 : f32 to vector<8x1xf32>
    %99 = arith.divf %97, %98 : vector<8x1xf32>
    %100 = vector.broadcast %99 : vector<8x1xf32> to vector<8x32xf32>
    %101 = arith.subf %95, %100 : vector<8x32xf32>
    %102 = arith.mulf %101, %101 : vector<8x32xf32>
    %cst_38 = arith.constant dense<0.000000e+00> : vector<8xf32>
    %103 = vector.multi_reduction <add>, %102, %cst_38 [1] : vector<8x32xf32> to vector<8xf32>
    %104 = vector.shape_cast %103 : vector<8xf32> to vector<8x1xf32>
    %cst_39 = arith.constant 3.200000e+01 : f32
    %105 = vector.broadcast %cst_39 : f32 to vector<8x1xf32>
    %106 = arith.divf %104, %105 : vector<8x1xf32>
    %107 = vector.broadcast %99 : vector<8x1xf32> to vector<8x32xf32>
    %108 = arith.subf %95, %107 : vector<8x32xf32>
    %cst_40 = arith.constant 9.99999974E-6 : f32
    %109 = vector.broadcast %cst_40 : f32 to vector<8x1xf32>
    %110 = arith.addf %106, %109 : vector<8x1xf32>
    %111 = math.rsqrt %110 : vector<8x1xf32>
    %112 = vector.broadcast %111 : vector<8x1xf32> to vector<8x32xf32>
    %113 = arith.mulf %108, %112 : vector<8x32xf32>
    %c72 = arith.constant 72 : index
    %c0_41 = arith.constant 0 : index
    %114 = vector.load %arg2[%c72, %c0_41] : memref<328x128xf32, #tpu.memory_space<vmem>>, vector<32x128xf32>
    %cst_42 = arith.constant dense<0.000000e+00> : vector<8x128xf32>
    %115 = tpu.matmul %113, %114, %cst_42 {dimension_numbers = #tpu.dot_dimension_numbers<[1], [0], [0], [1], [0, 0, 1, 1], [], []>} : vector<8x32xf32>, vector<32x128xf32>, vector<8x128xf32> -> vector<8x128xf32>
    %c6 = arith.constant 6 : index
    %c0_43 = arith.constant 0 : index
    %116 = vector.load %arg3[%c6, %c0_43] : memref<16x128xf32, #tpu.memory_space<vmem>>, vector<1x128xf32>
    %117 = vector.broadcast %116 : vector<1x128xf32> to vector<8x128xf32>
    %118 = arith.addf %115, %117 : vector<8x128xf32>
    %cst_44 = arith.constant 5.000000e-01 : f32
    %119 = vector.broadcast %cst_44 : f32 to vector<8x128xf32>
    %120 = arith.mulf %119, %118 : vector<8x128xf32>
    %121 = arith.mulf %118, %118 : vector<8x128xf32>
    %122 = arith.mulf %118, %121 : vector<8x128xf32>
    %cst_45 = arith.constant 4.471500e-02 : f32
    %123 = vector.broadcast %cst_45 : f32 to vector<8x128xf32>
    %124 = arith.mulf %123, %122 : vector<8x128xf32>
    %125 = arith.addf %118, %124 : vector<8x128xf32>
    %cst_46 = arith.constant 0.797884583 : f32
    %126 = vector.broadcast %cst_46 : f32 to vector<8x128xf32>
    %127 = arith.mulf %126, %125 : vector<8x128xf32>
    %128 = math.tanh %127 : vector<8x128xf32>
    %cst_47 = arith.constant 1.000000e+00 : f32
    %129 = vector.broadcast %cst_47 : f32 to vector<8x128xf32>
    %130 = arith.addf %129, %128 : vector<8x128xf32>
    %131 = arith.mulf %120, %130 : vector<8x128xf32>
    %c168_48 = arith.constant 168 : index
    %c32_49 = arith.constant 32 : index
    %132 = vector.load %arg2[%c168_48, %c32_49] : memref<328x128xf32, #tpu.memory_space<vmem>>, vector<128x32xf32>
    %cst_50 = arith.constant dense<0.000000e+00> : vector<8x32xf32>
    %133 = tpu.matmul %131, %132, %cst_50 {dimension_numbers = #tpu.dot_dimension_numbers<[1], [0], [0], [1], [0, 0, 1, 1], [], []>} : vector<8x128xf32>, vector<128x32xf32>, vector<8x32xf32> -> vector<8x32xf32>
    %134 = arith.addf %95, %133 : vector<8x32xf32>
    %c10 = arith.constant 10 : index
    %c0_51 = arith.constant 0 : index
    %135 = vector.load %arg3[%c10, %c0_51] : memref<16x128xf32, #tpu.memory_space<vmem>>, vector<1x32xf32>
    %136 = vector.broadcast %135 : vector<1x32xf32> to vector<8x32xf32>
    %137 = arith.addf %134, %136 : vector<8x32xf32>
    %cst_52 = arith.constant dense<0.000000e+00> : vector<8xf32>
    %138 = vector.multi_reduction <add>, %137, %cst_52 [1] : vector<8x32xf32> to vector<8xf32>
    %139 = vector.shape_cast %138 : vector<8xf32> to vector<8x1xf32>
    %cst_53 = arith.constant 3.200000e+01 : f32
    %140 = vector.broadcast %cst_53 : f32 to vector<8x1xf32>
    %141 = arith.divf %139, %140 : vector<8x1xf32>
    %142 = vector.broadcast %141 : vector<8x1xf32> to vector<8x32xf32>
    %143 = arith.subf %137, %142 : vector<8x32xf32>
    %144 = arith.mulf %143, %143 : vector<8x32xf32>
    %cst_54 = arith.constant dense<0.000000e+00> : vector<8xf32>
    %145 = vector.multi_reduction <add>, %144, %cst_54 [1] : vector<8x32xf32> to vector<8xf32>
    %146 = vector.shape_cast %145 : vector<8xf32> to vector<8x1xf32>
    %cst_55 = arith.constant 3.200000e+01 : f32
    %147 = vector.broadcast %cst_55 : f32 to vector<8x1xf32>
    %148 = arith.divf %146, %147 : vector<8x1xf32>
    %149 = vector.broadcast %141 : vector<8x1xf32> to vector<8x32xf32>
    %150 = arith.subf %137, %149 : vector<8x32xf32>
    %cst_56 = arith.constant 9.99999974E-6 : f32
    %151 = vector.broadcast %cst_56 : f32 to vector<8x1xf32>
    %152 = arith.addf %148, %151 : vector<8x1xf32>
    %153 = math.rsqrt %152 : vector<8x1xf32>
    %154 = vector.broadcast %153 : vector<8x1xf32> to vector<8x32xf32>
    %155 = arith.mulf %150, %154 : vector<8x32xf32>
    %c8_57 = arith.constant 8 : index
    %c64 = arith.constant 64 : index
    %156 = vector.load %arg2[%c8_57, %c64] : memref<328x128xf32, #tpu.memory_space<vmem>>, vector<32x32xf32>
    %cst_58 = arith.constant dense<0.000000e+00> : vector<8x32xf32>
    %157 = tpu.matmul %155, %156, %cst_58 {dimension_numbers = #tpu.dot_dimension_numbers<[1], [0], [0], [1], [0, 0, 1, 1], [], []>} : vector<8x32xf32>, vector<32x32xf32>, vector<8x32xf32> -> vector<8x32xf32>
    %158 = arith.addf %137, %157 : vector<8x32xf32>
    %c3 = arith.constant 3 : index
    %c0_59 = arith.constant 0 : index
    %159 = vector.load %arg3[%c3, %c0_59] : memref<16x128xf32, #tpu.memory_space<vmem>>, vector<1x32xf32>
    %160 = vector.broadcast %159 : vector<1x32xf32> to vector<8x32xf32>
    %161 = arith.addf %158, %160 : vector<8x32xf32>
    %cst_60 = arith.constant dense<0.000000e+00> : vector<8xf32>
    %162 = vector.multi_reduction <add>, %161, %cst_60 [1] : vector<8x32xf32> to vector<8xf32>
    %163 = vector.shape_cast %162 : vector<8xf32> to vector<8x1xf32>
    %cst_61 = arith.constant 3.200000e+01 : f32
    %164 = vector.broadcast %cst_61 : f32 to vector<8x1xf32>
    %165 = arith.divf %163, %164 : vector<8x1xf32>
    %166 = vector.broadcast %165 : vector<8x1xf32> to vector<8x32xf32>
    %167 = arith.subf %161, %166 : vector<8x32xf32>
    %168 = arith.mulf %167, %167 : vector<8x32xf32>
    %cst_62 = arith.constant dense<0.000000e+00> : vector<8xf32>
    %169 = vector.multi_reduction <add>, %168, %cst_62 [1] : vector<8x32xf32> to vector<8xf32>
    %170 = vector.shape_cast %169 : vector<8xf32> to vector<8x1xf32>
    %cst_63 = arith.constant 3.200000e+01 : f32
    %171 = vector.broadcast %cst_63 : f32 to vector<8x1xf32>
    %172 = arith.divf %170, %171 : vector<8x1xf32>
    %173 = vector.broadcast %165 : vector<8x1xf32> to vector<8x32xf32>
    %174 = arith.subf %161, %173 : vector<8x32xf32>
    %cst_64 = arith.constant 9.99999974E-6 : f32
    %175 = vector.broadcast %cst_64 : f32 to vector<8x1xf32>
    %176 = arith.addf %172, %175 : vector<8x1xf32>
    %177 = math.rsqrt %176 : vector<8x1xf32>
    %178 = vector.broadcast %177 : vector<8x1xf32> to vector<8x32xf32>
    %179 = arith.mulf %174, %178 : vector<8x32xf32>
    %c104 = arith.constant 104 : index
    %c0_65 = arith.constant 0 : index
    %180 = vector.load %arg2[%c104, %c0_65] : memref<328x128xf32, #tpu.memory_space<vmem>>, vector<32x128xf32>
    %cst_66 = arith.constant dense<0.000000e+00> : vector<8x128xf32>
    %181 = tpu.matmul %179, %180, %cst_66 {dimension_numbers = #tpu.dot_dimension_numbers<[1], [0], [0], [1], [0, 0, 1, 1], [], []>} : vector<8x32xf32>, vector<32x128xf32>, vector<8x128xf32> -> vector<8x128xf32>
    %c7 = arith.constant 7 : index
    %c0_67 = arith.constant 0 : index
    %182 = vector.load %arg3[%c7, %c0_67] : memref<16x128xf32, #tpu.memory_space<vmem>>, vector<1x128xf32>
    %183 = vector.broadcast %182 : vector<1x128xf32> to vector<8x128xf32>
    %184 = arith.addf %181, %183 : vector<8x128xf32>
    %cst_68 = arith.constant 5.000000e-01 : f32
    %185 = vector.broadcast %cst_68 : f32 to vector<8x128xf32>
    %186 = arith.mulf %185, %184 : vector<8x128xf32>
    %187 = arith.mulf %184, %184 : vector<8x128xf32>
    %188 = arith.mulf %184, %187 : vector<8x128xf32>
    %cst_69 = arith.constant 4.471500e-02 : f32
    %189 = vector.broadcast %cst_69 : f32 to vector<8x128xf32>
    %190 = arith.mulf %189, %188 : vector<8x128xf32>
    %191 = arith.addf %184, %190 : vector<8x128xf32>
    %cst_70 = arith.constant 0.797884583 : f32
    %192 = vector.broadcast %cst_70 : f32 to vector<8x128xf32>
    %193 = arith.mulf %192, %191 : vector<8x128xf32>
    %194 = math.tanh %193 : vector<8x128xf32>
    %cst_71 = arith.constant 1.000000e+00 : f32
    %195 = vector.broadcast %cst_71 : f32 to vector<8x128xf32>
    %196 = arith.addf %195, %194 : vector<8x128xf32>
    %197 = arith.mulf %186, %196 : vector<8x128xf32>
    %c168_72 = arith.constant 168 : index
    %c64_73 = arith.constant 64 : index
    %198 = vector.load %arg2[%c168_72, %c64_73] : memref<328x128xf32, #tpu.memory_space<vmem>>, vector<128x32xf32>
    %cst_74 = arith.constant dense<0.000000e+00> : vector<8x32xf32>
    %199 = tpu.matmul %197, %198, %cst_74 {dimension_numbers = #tpu.dot_dimension_numbers<[1], [0], [0], [1], [0, 0, 1, 1], [], []>} : vector<8x128xf32>, vector<128x32xf32>, vector<8x32xf32> -> vector<8x32xf32>
    %200 = arith.addf %161, %199 : vector<8x32xf32>
    %c11 = arith.constant 11 : index
    %c0_75 = arith.constant 0 : index
    %201 = vector.load %arg3[%c11, %c0_75] : memref<16x128xf32, #tpu.memory_space<vmem>>, vector<1x32xf32>
    %202 = vector.broadcast %201 : vector<1x32xf32> to vector<8x32xf32>
    %203 = arith.addf %200, %202 : vector<8x32xf32>
    %cst_76 = arith.constant dense<0.000000e+00> : vector<8xf32>
    %204 = vector.multi_reduction <add>, %203, %cst_76 [1] : vector<8x32xf32> to vector<8xf32>
    %205 = vector.shape_cast %204 : vector<8xf32> to vector<8x1xf32>
    %cst_77 = arith.constant 3.200000e+01 : f32
    %206 = vector.broadcast %cst_77 : f32 to vector<8x1xf32>
    %207 = arith.divf %205, %206 : vector<8x1xf32>
    %208 = vector.broadcast %207 : vector<8x1xf32> to vector<8x32xf32>
    %209 = arith.subf %203, %208 : vector<8x32xf32>
    %210 = arith.mulf %209, %209 : vector<8x32xf32>
    %cst_78 = arith.constant dense<0.000000e+00> : vector<8xf32>
    %211 = vector.multi_reduction <add>, %210, %cst_78 [1] : vector<8x32xf32> to vector<8xf32>
    %212 = vector.shape_cast %211 : vector<8xf32> to vector<8x1xf32>
    %cst_79 = arith.constant 3.200000e+01 : f32
    %213 = vector.broadcast %cst_79 : f32 to vector<8x1xf32>
    %214 = arith.divf %212, %213 : vector<8x1xf32>
    %215 = vector.broadcast %207 : vector<8x1xf32> to vector<8x32xf32>
    %216 = arith.subf %203, %215 : vector<8x32xf32>
    %cst_80 = arith.constant 9.99999974E-6 : f32
    %217 = vector.broadcast %cst_80 : f32 to vector<8x1xf32>
    %218 = arith.addf %214, %217 : vector<8x1xf32>
    %219 = math.rsqrt %218 : vector<8x1xf32>
    %220 = vector.broadcast %219 : vector<8x1xf32> to vector<8x32xf32>
    %221 = arith.mulf %216, %220 : vector<8x32xf32>
    %c8_81 = arith.constant 8 : index
    %c96 = arith.constant 96 : index
    %222 = vector.load %arg2[%c8_81, %c96] : memref<328x128xf32, #tpu.memory_space<vmem>>, vector<32x32xf32>
    %cst_82 = arith.constant dense<0.000000e+00> : vector<8x32xf32>
    %223 = tpu.matmul %221, %222, %cst_82 {dimension_numbers = #tpu.dot_dimension_numbers<[1], [0], [0], [1], [0, 0, 1, 1], [], []>} : vector<8x32xf32>, vector<32x32xf32>, vector<8x32xf32> -> vector<8x32xf32>
    %224 = arith.addf %203, %223 : vector<8x32xf32>
    %c4 = arith.constant 4 : index
    %c0_83 = arith.constant 0 : index
    %225 = vector.load %arg3[%c4, %c0_83] : memref<16x128xf32, #tpu.memory_space<vmem>>, vector<1x32xf32>
    %226 = vector.broadcast %225 : vector<1x32xf32> to vector<8x32xf32>
    %227 = arith.addf %224, %226 : vector<8x32xf32>
    %cst_84 = arith.constant dense<0.000000e+00> : vector<8xf32>
    %228 = vector.multi_reduction <add>, %227, %cst_84 [1] : vector<8x32xf32> to vector<8xf32>
    %229 = vector.shape_cast %228 : vector<8xf32> to vector<8x1xf32>
    %cst_85 = arith.constant 3.200000e+01 : f32
    %230 = vector.broadcast %cst_85 : f32 to vector<8x1xf32>
    %231 = arith.divf %229, %230 : vector<8x1xf32>
    %232 = vector.broadcast %231 : vector<8x1xf32> to vector<8x32xf32>
    %233 = arith.subf %227, %232 : vector<8x32xf32>
    %234 = arith.mulf %233, %233 : vector<8x32xf32>
    %cst_86 = arith.constant dense<0.000000e+00> : vector<8xf32>
    %235 = vector.multi_reduction <add>, %234, %cst_86 [1] : vector<8x32xf32> to vector<8xf32>
    %236 = vector.shape_cast %235 : vector<8xf32> to vector<8x1xf32>
    %cst_87 = arith.constant 3.200000e+01 : f32
    %237 = vector.broadcast %cst_87 : f32 to vector<8x1xf32>
    %238 = arith.divf %236, %237 : vector<8x1xf32>
    %239 = vector.broadcast %231 : vector<8x1xf32> to vector<8x32xf32>
    %240 = arith.subf %227, %239 : vector<8x32xf32>
    %cst_88 = arith.constant 9.99999974E-6 : f32
    %241 = vector.broadcast %cst_88 : f32 to vector<8x1xf32>
    %242 = arith.addf %238, %241 : vector<8x1xf32>
    %243 = math.rsqrt %242 : vector<8x1xf32>
    %244 = vector.broadcast %243 : vector<8x1xf32> to vector<8x32xf32>
    %245 = arith.mulf %240, %244 : vector<8x32xf32>
    %c136 = arith.constant 136 : index
    %c0_89 = arith.constant 0 : index
    %246 = vector.load %arg2[%c136, %c0_89] : memref<328x128xf32, #tpu.memory_space<vmem>>, vector<32x128xf32>
    %cst_90 = arith.constant dense<0.000000e+00> : vector<8x128xf32>
    %247 = tpu.matmul %245, %246, %cst_90 {dimension_numbers = #tpu.dot_dimension_numbers<[1], [0], [0], [1], [0, 0, 1, 1], [], []>} : vector<8x32xf32>, vector<32x128xf32>, vector<8x128xf32> -> vector<8x128xf32>
    %c8_91 = arith.constant 8 : index
    %c0_92 = arith.constant 0 : index
    %248 = vector.load %arg3[%c8_91, %c0_92] : memref<16x128xf32, #tpu.memory_space<vmem>>, vector<1x128xf32>
    %249 = vector.broadcast %248 : vector<1x128xf32> to vector<8x128xf32>
    %250 = arith.addf %247, %249 : vector<8x128xf32>
    %cst_93 = arith.constant 5.000000e-01 : f32
    %251 = vector.broadcast %cst_93 : f32 to vector<8x128xf32>
    %252 = arith.mulf %251, %250 : vector<8x128xf32>
    %253 = arith.mulf %250, %250 : vector<8x128xf32>
    %254 = arith.mulf %250, %253 : vector<8x128xf32>
    %cst_94 = arith.constant 4.471500e-02 : f32
    %255 = vector.broadcast %cst_94 : f32 to vector<8x128xf32>
    %256 = arith.mulf %255, %254 : vector<8x128xf32>
    %257 = arith.addf %250, %256 : vector<8x128xf32>
    %cst_95 = arith.constant 0.797884583 : f32
    %258 = vector.broadcast %cst_95 : f32 to vector<8x128xf32>
    %259 = arith.mulf %258, %257 : vector<8x128xf32>
    %260 = math.tanh %259 : vector<8x128xf32>
    %cst_96 = arith.constant 1.000000e+00 : f32
    %261 = vector.broadcast %cst_96 : f32 to vector<8x128xf32>
    %262 = arith.addf %261, %260 : vector<8x128xf32>
    %263 = arith.mulf %252, %262 : vector<8x128xf32>
    %c168_97 = arith.constant 168 : index
    %c96_98 = arith.constant 96 : index
    %264 = vector.load %arg2[%c168_97, %c96_98] : memref<328x128xf32, #tpu.memory_space<vmem>>, vector<128x32xf32>
    %cst_99 = arith.constant dense<0.000000e+00> : vector<8x32xf32>
    %265 = tpu.matmul %263, %264, %cst_99 {dimension_numbers = #tpu.dot_dimension_numbers<[1], [0], [0], [1], [0, 0, 1, 1], [], []>} : vector<8x128xf32>, vector<128x32xf32>, vector<8x32xf32> -> vector<8x32xf32>
    %266 = arith.addf %227, %265 : vector<8x32xf32>
    %c12 = arith.constant 12 : index
    %c0_100 = arith.constant 0 : index
    %267 = vector.load %arg3[%c12, %c0_100] : memref<16x128xf32, #tpu.memory_space<vmem>>, vector<1x32xf32>
    %268 = vector.broadcast %267 : vector<1x32xf32> to vector<8x32xf32>
    %269 = arith.addf %266, %268 : vector<8x32xf32>
    %cst_101 = arith.constant dense<0.000000e+00> : vector<8xf32>
    %270 = vector.multi_reduction <add>, %269, %cst_101 [1] : vector<8x32xf32> to vector<8xf32>
    %271 = vector.shape_cast %270 : vector<8xf32> to vector<8x1xf32>
    %cst_102 = arith.constant 3.200000e+01 : f32
    %272 = vector.broadcast %cst_102 : f32 to vector<8x1xf32>
    %273 = arith.divf %271, %272 : vector<8x1xf32>
    %274 = vector.broadcast %273 : vector<8x1xf32> to vector<8x32xf32>
    %275 = arith.subf %269, %274 : vector<8x32xf32>
    %276 = arith.mulf %275, %275 : vector<8x32xf32>
    %cst_103 = arith.constant dense<0.000000e+00> : vector<8xf32>
    %277 = vector.multi_reduction <add>, %276, %cst_103 [1] : vector<8x32xf32> to vector<8xf32>
    %278 = vector.shape_cast %277 : vector<8xf32> to vector<8x1xf32>
    %cst_104 = arith.constant 3.200000e+01 : f32
    %279 = vector.broadcast %cst_104 : f32 to vector<8x1xf32>
    %280 = arith.divf %278, %279 : vector<8x1xf32>
    %281 = vector.broadcast %273 : vector<8x1xf32> to vector<8x32xf32>
    %282 = arith.subf %269, %281 : vector<8x32xf32>
    %cst_105 = arith.constant 9.99999974E-6 : f32
    %283 = vector.broadcast %cst_105 : f32 to vector<8x1xf32>
    %284 = arith.addf %280, %283 : vector<8x1xf32>
    %285 = math.rsqrt %284 : vector<8x1xf32>
    %286 = vector.broadcast %285 : vector<8x1xf32> to vector<8x32xf32>
    %287 = arith.mulf %282, %286 : vector<8x32xf32>
    %c296 = arith.constant 296 : index
    %c0_106 = arith.constant 0 : index
    %288 = vector.load %arg2[%c296, %c0_106] : memref<328x128xf32, #tpu.memory_space<vmem>>, vector<32x128xf32>
    %cst_107 = arith.constant dense<0.000000e+00> : vector<8x128xf32>
    %289 = tpu.matmul %287, %288, %cst_107 {dimension_numbers = #tpu.dot_dimension_numbers<[1], [0], [0], [1], [0, 0, 1, 1], [], []>} : vector<8x32xf32>, vector<32x128xf32>, vector<8x128xf32> -> vector<8x128xf32>
    %c13 = arith.constant 13 : index
    %c0_108 = arith.constant 0 : index
    %290 = vector.load %arg3[%c13, %c0_108] : memref<16x128xf32, #tpu.memory_space<vmem>>, vector<1x128xf32>
    %291 = vector.broadcast %290 : vector<1x128xf32> to vector<8x128xf32>
    %292 = arith.addf %289, %291 : vector<8x128xf32>
    %cst_109 = arith.constant 0.000000e+00 : f32
    %293 = vector.broadcast %cst_109 : f32 to vector<8x128xf32>
    %294 = arith.maximumf %292, %293 : vector<8x128xf32>
    %c0_110 = arith.constant 0 : index
    %c0_111 = arith.constant 0 : index
    %295 = vector.load %arg4[%c0_110, %c0_111] : memref<8x128xf32, #tpu.memory_space<vmem>>, vector<8x128xf32>
    tpu.vector_store %arg4[%c0_110, %c0_111], %294 {strides = array<i32>} : memref<8x128xf32, #tpu.memory_space<vmem>>, vector<8x128xf32>,
    return
  }
  func.func @transform_0(%arg0: i32) -> (i32, i32) {
    %c0_i32 = arith.constant 0 : i32
    %c0_i32_0 = arith.constant 0 : i32
    return %arg0, %c0_i32 : i32, i32
  }
  func.func @transform_1(%arg0: i32) -> (i32, i32) {
    %c0_i32 = arith.constant 0 : i32
    %c0_i32_0 = arith.constant 0 : i32
    %c0_i32_1 = arith.constant 0 : i32
    return %c0_i32, %c0_i32_0 : i32, i32
  }
  func.func @transform_2(%arg0: i32) -> (i32, i32) {
    %c0_i32 = arith.constant 0 : i32
    %c0_i32_0 = arith.constant 0 : i32
    %c0_i32_1 = arith.constant 0 : i32
    return %c0_i32, %c0_i32_0 : i32, i32
  }
  func.func @transform_3(%arg0: i32) -> (i32, i32) {
    %c0_i32 = arith.constant 0 : i32
    %c0_i32_0 = arith.constant 0 : i32
    return %arg0, %c0_i32 : i32, i32
  }
}

</mosaic_0001>

<llo_original>
// kernel: tpu_custom_call.1
$region0: #{tpu_custom_call.1}
  #allocation0 [shape = 'u32[]', space=smem, size = 0x4, offset = 0x4, fixed_abs, tag = 'smem constant byte address 0x4 - core index']
  #allocation1 [shape = 'u32[144,128]{1,0:T(1,128)}', space=vmem, size = 0x12000, scoped, tag = 'internal scratch']
  %s0 = inlined_call_operand.hbm [shape: f32[8,8], index: 0, kind: input, shape index: {}]
  %s1 = inlined_call_operand.hbm [shape: f32[328,128], index: 1, kind: input, shape index: {}]
  %s2 = inlined_call_operand.hbm [shape: f32[16,128], index: 2, kind: input, shape index: {}]
  %s3 = inlined_call_operand.hbm [shape: f32[8,128], index: 3, kind: output, shape index: {}]
  %s4 = sld [smem:[#allocation0]]
  $region34: #{tpu_custom_call.1} parent=0
    _
  %s6 = ssub.s32 1, %s4
  %s7 = scalar_select 0, %s6, %s4
  $region1: #{tpu_custom_call.1} parent=0
    #allocation2 [shape = 'u8[4096]{0}', space=vmem, size = 0x1000, scoped, tag = 'input window, operand 0, single buffered']
    #allocation3 [shape = 's32[1]{0}', space=sflag, size = 0x4, scoped, tag = 'scoped memory for tpu_custom_call.1']
    #allocation4 [shape = 's32[1]{0}', space=sflag, size = 0x4, scoped, tag = 'scoped memory for tpu_custom_call.1']
    #allocation5 [shape = 'u8[167936]{0}', space=vmem, size = 0x29000, scoped, tag = 'input window, operand 1, single buffered']
    #allocation6 [shape = 's32[1]{0}', space=sflag, size = 0x4, scoped, tag = 'scoped memory for tpu_custom_call.1']
    #allocation7 [shape = 'u8[8192]{0}', space=vmem, size = 0x2000, scoped, tag = 'input window, operand 2, single buffered']
    #allocation8 [shape = 'u8[4096]{0}', space=vmem, size = 0x1000, scoped, tag = 'output window, operand 0, single buffered']
    %8 = vsyncpa [#allocation3], 0
    %9 = vsyncpa [#allocation6], 0
    %10 = vsyncpa [#allocation4], 0
    // Predicated region
    $region2: #{tpu_custom_call.1} parent=1 // pred_check
      _
    $region3: #{tpu_custom_call.1} parent=1 // pred_check_branch
      %12 = sbr.rel (0) target = $region5
    $region4: #{tpu_custom_call.1} parent=1 // pred_region
      %s14 = ssub.s32 128, 128
      %15 = vsyncadd [#allocation3], %s14
      %s17 = sshll.u32 [#allocation2], 4
      %s18 = int_to_ptr.vmem [resolvable:$true] %s17
      %20 = dma.hbm_to_vmem [thread:$0]  %s0, 128, %s18, [#allocation3]
    $region5: #{tpu_custom_call.1} parent=1 // pred_fallthru
      _
    // Predicated region
    $region6: #{tpu_custom_call.1} parent=1 // pred_check
      _
    $region7: #{tpu_custom_call.1} parent=1 // pred_check_branch
      %22 = sbr.rel (0) target = $region9
    $region8: #{tpu_custom_call.1} parent=1 // pred_region
      %s24 = ssub.s32 5248, 5248
      %25 = vsyncadd [#allocation6], %s24
      %s26 = sshll.u32 [#allocation5], 4
      %s27 = int_to_ptr.vmem [resolvable:$true] %s26
      %32 = dma.hbm_to_vmem [thread:$0]  %s1, 5248, %s27, [#allocation6], 128, 128, 8
    $region9: #{tpu_custom_call.1} parent=1 // pred_fallthru
      _
    // Predicated region
    $region10: #{tpu_custom_call.1} parent=1 // pred_check
      _
    $region11: #{tpu_custom_call.1} parent=1 // pred_check_branch
      %34 = sbr.rel (0) target = $region13
    $region12: #{tpu_custom_call.1} parent=1 // pred_region
      %s36 = ssub.s32 256, 256
      %37 = vsyncadd [#allocation6], %s36
      %s38 = sshll.u32 [#allocation7], 4
      %s39 = int_to_ptr.vmem [resolvable:$true] %s38
      %44 = dma.hbm_to_vmem [thread:$0]  %s2, 256, %s39, [#allocation6], 128, 128, 8
    $region13: #{tpu_custom_call.1} parent=1 // pred_fallthru
      _
    // Predicated region
    $region14: #{tpu_custom_call.1} parent=1 // pred_check
      _
    $region15: #{tpu_custom_call.1} parent=1 // pred_check_branch
      %46 = sbr.rel (0) target = $region17
    $region16: #{tpu_custom_call.1} parent=1 // pred_region
      %47 = dma.done [#allocation3], 128
    $region17: #{tpu_custom_call.1} parent=1 // pred_fallthru
      _
    // Predicated region
    $region18: #{tpu_custom_call.1} parent=1 // pred_check
      _
    $region19: #{tpu_custom_call.1} parent=1 // pred_check_branch
      %49 = sbr.rel (0) target = $region21
    $region20: #{tpu_custom_call.1} parent=1 // pred_region
      %50 = dma.done [#allocation6], 5248
    $region21: #{tpu_custom_call.1} parent=1 // pred_fallthru
      _
    // Predicated region
    $region22: #{tpu_custom_call.1} parent=1 // pred_check
      _
    $region23: #{tpu_custom_call.1} parent=1 // pred_check_branch
      %52 = sbr.rel (0) target = $region25
    $region24: #{tpu_custom_call.1} parent=1 // pred_region
      %53 = dma.done [#allocation6], 256
    $region25: #{tpu_custom_call.1} parent=1 // pred_fallthru
      _
    %v54 = vld [vmem:[#allocation2] sm:$0xff]
    %v55 = vld [vmem:[#allocation5] sm:$0xff]
    %v56 = vld [vmem:[#allocation7] sm:$0x1]
    %v57 = vlaneseq
    %v58 = vshrl.u32 %v57, 7
    %v59 = vsub.s32 0, %v58
    %v60 = vrot.slane %v56, %v59
    %vm61 = vcmask 64512
    %v63 = vsel %vm61, %v54, 0
    %65 = vmatprep.subr.mxu0 0.0
    %66 = vmatpush1.msra.mxu0 %v55
    %67 = vmatprep.subr.mxu0 0.0
    %68 = vmatpush1.msra.mxu0 0.0
    %69 = vmatprep.subr.mxu0 0.0
    %70 = vmatpush1.msra.mxu0 0.0
    %71 = vmatprep.subr.mxu0 0.0
    %72 = vmatpush1.msra.mxu0 0.0
    %73 = vmatprep.subr.mxu0 0.0
    %74 = vmatpush1.msra.mxu0 0.0
    %75 = vmatprep.subr.mxu0 0.0
    %76 = vmatpush1.msra.mxu0 0.0
    %77 = vmatprep.subr.mxu0 0.0
    %78 = vmatpush1.msra.mxu0 0.0
    %79 = vmatprep.subr.mxu0 0.0
    %80 = vmatpush1.msra.mxu0 0.0
    %81 = vmatprep.subr.mxu0 0.0
    %82 = vmatpush1.msra.mxu0 0.0
    %83 = vmatprep.subr.mxu0 0.0
    %84 = vmatpush1.msra.mxu0 0.0
    %85 = vmatprep.subr.mxu0 0.0
    %86 = vmatpush1.msra.mxu0 0.0
    %87 = vmatprep.subr.mxu0 0.0
    %88 = vmatpush1.msra.mxu0 0.0
    %89 = vmatprep.subr.mxu0 0.0
    %90 = vmatpush1.msra.mxu0 0.0
    %91 = vmatprep.subr.mxu0 0.0
    %92 = vmatpush1.msra.mxu0 0.0
    %93 = vmatprep.subr.mxu0 0.0
    %94 = vmatpush1.msra.mxu0 0.0
    %95 = vmatprep.subr.mxu0 0.0
    %96 = vmatpush1.msra.mxu0 0.0
    %97 = vmatprep.subr.mxu0 0.0
    %98 = vmatpush1.msra.mxu0 0.0
    %99 = vmatprep.subr.mxu0 0.0
    %100 = vmatpush1.msra.mxu0 0.0
    %101 = vmatprep.subr.mxu0 0.0
    %102 = vmatpush1.msra.mxu0 0.0
    %103 = vmatprep.subr.mxu0 0.0
    %104 = vmatpush1.msra.mxu0 0.0
    %105 = vmatprep.subr.mxu0 0.0
    %106 = vmatpush1.msra.mxu0 0.0
    %107 = vmatprep.subr.mxu0 0.0
    %108 = vmatpush1.msra.mxu0 0.0
    %109 = vmatprep.subr.mxu0 0.0
    %110 = vmatpush1.msra.mxu0 0.0
    %111 = vmatprep.subr.mxu0 0.0
    %112 = vmatpush1.msra.mxu0 0.0
    %113 = vmatprep.subr.mxu0 0.0
    %114 = vmatpush1.msra.mxu0 0.0
    %115 = vmatprep.subr.mxu0 0.0
    %116 = vmatpush1.msra.mxu0 0.0
    %117 = vmatprep.subr.mxu0 0.0
    %118 = vmatpush1.msra.mxu0 0.0
    %119 = vmatprep.subr.mxu0 0.0
    %120 = vmatpush1.msra.mxu0 0.0
    %121 = vmatprep.subr.mxu0 0.0
    %122 = vmatpush1.msra.mxu0 0.0
    %123 = vmatprep.subr.mxu0 0.0
    %124 = vmatpush1.msra.mxu0 0.0
    %125 = vmatprep.subr.mxu0 0.0
    %126 = vmatpush1.msra.mxu0 0.0
    %127 = vmatprep.subr.mxu0 0.0
    %128 = vmatpush1.msra.mxu0 0.0
    %129 = vmatprep.mubr.f32.mxu0 0.0
    %130 = vmatmul.mubr.f32.gmra.mrb[0].mxu0 %v63
    %v131 = vpop.f32.mrb[0].mxu0
    %v132 = vadd.f32 %v60, %v131
    %v133 = vpop.f32.mrb[0].mxu0
    %134 = vdwg.mxu0
    %vm135 = vcmask 261120
    %v136 = vsel %vm135, %v132, 0.0
    %137 = vadd.xlane.f32.xlu0 %v136
    %v138 = vpop.xlane.xlu0 %137
    %v139 = vrcp.pop 32.0
    %v140 = vmul.f32 %v138, %v139
    %v141 = vsub.f32 %v132, %v140
    %v142 = vmul.f32 %v141, %v141
    %v143 = vsel %vm135, %v142, 0.0
    %144 = vadd.xlane.f32.xlu0 %v143
    %v145 = vpop.xlane.xlu0 %144
    %v146 = vmul.f32 %v145, %v139
    %v147 = vadd.f32 %v146, 1e-05
    %v148 = vrsqrt.pop %v147
    %v149 = vmul.f32 %v141, %v148
    %v150 = vld [vmem:[#allocation5 + $0x8] sm:$0xff]
    %v151 = vld [vmem:[#allocation5 + $0x10] sm:$0xff]
    %v152 = vld [vmem:[#allocation5 + $0x18] sm:$0xff]
    %v153 = vld [vmem:[#allocation5 + $0x20] sm:$0xff]
    %v155 = vsel %vm135, %v149, 0
    %157 = vmatprep.subr.mxu0 0.0
    %158 = vmatpush1.msra.mxu0 %v150
    %159 = vmatprep.subr.mxu0 0.0
    %160 = vmatpush1.msra.mxu0 %v151
    %161 = vmatprep.subr.mxu0 0.0
    %162 = vmatpush1.msra.mxu0 %v152
    %163 = vmatprep.subr.mxu0 0.0
    %164 = vmatpush1.msra.mxu0 %v153
    %165 = vmatprep.subr.mxu0 0.0
    %166 = vmatpush1.msra.mxu0 0.0
    %167 = vmatprep.subr.mxu0 0.0
    %168 = vmatpush1.msra.mxu0 0.0
    %169 = vmatprep.subr.mxu0 0.0
    %170 = vmatpush1.msra.mxu0 0.0
    %171 = vmatprep.subr.mxu0 0.0
    %172 = vmatpush1.msra.mxu0 0.0
    %173 = vmatprep.subr.mxu0 0.0
    %174 = vmatpush1.msra.mxu0 0.0
    %175 = vmatprep.subr.mxu0 0.0
    %176 = vmatpush1.msra.mxu0 0.0
    %177 = vmatprep.subr.mxu0 0.0
    %178 = vmatpush1.msra.mxu0 0.0
    %179 = vmatprep.subr.mxu0 0.0
    %180 = vmatpush1.msra.mxu0 0.0
    %181 = vmatprep.subr.mxu0 0.0
    %182 = vmatpush1.msra.mxu0 0.0
    %183 = vmatprep.subr.mxu0 0.0
    %184 = vmatpush1.msra.mxu0 0.0
    %185 = vmatprep.subr.mxu0 0.0
    %186 = vmatpush1.msra.mxu0 0.0
    %187 = vmatprep.subr.mxu0 0.0
    %188 = vmatpush1.msra.mxu0 0.0
    %189 = vmatprep.subr.mxu0 0.0
    %190 = vmatpush1.msra.mxu0 0.0
    %191 = vmatprep.subr.mxu0 0.0
    %192 = vmatpush1.msra.mxu0 0.0
    %193 = vmatprep.subr.mxu0 0.0
    %194 = vmatpush1.msra.mxu0 0.0
    %195 = vmatprep.subr.mxu0 0.0
    %196 = vmatpush1.msra.mxu0 0.0
    %197 = vmatprep.subr.mxu0 0.0
    %198 = vmatpush1.msra.mxu0 0.0
    %199 = vmatprep.subr.mxu0 0.0
    %200 = vmatpush1.msra.mxu0 0.0
    %201 = vmatprep.subr.mxu0 0.0
    %202 = vmatpush1.msra.mxu0 0.0
    %203 = vmatprep.subr.mxu0 0.0
    %204 = vmatpush1.msra.mxu0 0.0
    %205 = vmatprep.subr.mxu0 0.0
    %206 = vmatpush1.msra.mxu0 0.0
    %207 = vmatprep.subr.mxu0 0.0
    %208 = vmatpush1.msra.mxu0 0.0
    %209 = vmatprep.subr.mxu0 0.0
    %210 = vmatpush1.msra.mxu0 0.0
    %211 = vmatprep.subr.mxu0 0.0
    %212 = vmatpush1.msra.mxu0 0.0
    %213 = vmatprep.subr.mxu0 0.0
    %214 = vmatpush1.msra.mxu0 0.0
    %215 = vmatprep.subr.mxu0 0.0
    %216 = vmatpush1.msra.mxu0 0.0
    %217 = vmatprep.subr.mxu0 0.0
    %218 = vmatpush1.msra.mxu0 0.0
    %219 = vmatprep.subr.mxu0 0.0
    %220 = vmatpush1.msra.mxu0 0.0
    %221 = vmatprep.mubr.f32.mxu0 0.0
    %222 = vmatmul.mubr.f32.gmra.mrb[0].mxu0 %v155
    %v223 = vpop.f32.mrb[0].mxu0
    %v224 = vadd.f32 0.0, %v223
    %v225 = vpop.f32.mrb[0].mxu0
    %226 = vdwg.mxu0
    %v227 = vadd.f32 %v132, %v224
    %v228 = vld [vmem:[#allocation7 + $0x1] sm:$0x1]
    %v229 = vlaneseq
    %v230 = vshrl.u32 %v229, 7
    %v231 = vsub.s32 0, %v230
    %v232 = vrot.slane %v228, %v231
    %v233 = vadd.f32 %v227, %v232
    %v234 = vsel %vm135, %v233, 0.0
    %235 = vadd.xlane.f32.xlu0 %v234
    %v236 = vpop.xlane.xlu0 %235
    %v237 = vmul.f32 %v236, %v139
    %v238 = vsub.f32 %v233, %v237
    %v239 = vmul.f32 %v238, %v238
    %v240 = vsel %vm135, %v239, 0.0
    %241 = vadd.xlane.f32.xlu0 %v240
    %v242 = vpop.xlane.xlu0 %241
    %v243 = vmul.f32 %v242, %v139
    %v244 = vadd.f32 %v243, 1e-05
    %v245 = vrsqrt.pop %v244
    %v246 = vmul.f32 %v238, %v245
    %v247 = vld [vmem:[#allocation5 + $0x28] sm:$0xff]
    %v248 = vld [vmem:[#allocation5 + $0x30] sm:$0xff]
    %v249 = vld [vmem:[#allocation5 + $0x38] sm:$0xff]
    %v250 = vld [vmem:[#allocation5 + $0x40] sm:$0xff]
    %v251 = vld [vmem:[#allocation7 + $0x5] sm:$0x1]
    %v252 = vlaneseq
    %v253 = vshrl.u32 %v252, 7
    %v254 = vsub.s32 0, %v253
    %v255 = vrot.slane %v251, %v254
    %v257 = vsel %vm135, %v246, 0
    %259 = vmatprep.subr.mxu0 0.0
    %260 = vmatpush1.msra.mxu0 %v247
    %261 = vmatprep.subr.mxu0 0.0
    %262 = vmatpush1.msra.mxu0 %v248
    %263 = vmatprep.subr.mxu0 0.0
    %264 = vmatpush1.msra.mxu0 %v249
    %265 = vmatprep.subr.mxu0 0.0
    %266 = vmatpush1.msra.mxu0 %v250
    %267 = vmatprep.subr.mxu0 0.0
    %268 = vmatpush1.msra.mxu0 0.0
    %269 = vmatprep.subr.mxu0 0.0
    %270 = vmatpush1.msra.mxu0 0.0
    %271 = vmatprep.subr.mxu0 0.0
    %272 = vmatpush1.msra.mxu0 0.0
    %273 = vmatprep.subr.mxu0 0.0
    %274 = vmatpush1.msra.mxu0 0.0
    %275 = vmatprep.subr.mxu0 0.0
    %276 = vmatpush1.msra.mxu0 0.0
    %277 = vmatprep.subr.mxu0 0.0
    %278 = vmatpush1.msra.mxu0 0.0
    %279 = vmatprep.subr.mxu0 0.0
    %280 = vmatpush1.msra.mxu0 0.0
    %281 = vmatprep.subr.mxu0 0.0
    %282 = vmatpush1.msra.mxu0 0.0
    %283 = vmatprep.subr.mxu0 0.0
    %284 = vmatpush1.msra.mxu0 0.0
    %285 = vmatprep.subr.mxu0 0.0
    %286 = vmatpush1.msra.mxu0 0.0
    %287 = vmatprep.subr.mxu0 0.0
    %288 = vmatpush1.msra.mxu0 0.0
    %289 = vmatprep.subr.mxu0 0.0
    %290 = vmatpush1.msra.mxu0 0.0
    %291 = vmatprep.subr.mxu0 0.0
    %292 = vmatpush1.msra.mxu0 0.0
    %293 = vmatprep.subr.mxu0 0.0
    %294 = vmatpush1.msra.mxu0 0.0
    %295 = vmatprep.subr.mxu0 0.0
    %296 = vmatpush1.msra.mxu0 0.0
    %297 = vmatprep.subr.mxu0 0.0
    %298 = vmatpush1.msra.mxu0 0.0
    %299 = vmatprep.subr.mxu0 0.0
    %300 = vmatpush1.msra.mxu0 0.0
    %301 = vmatprep.subr.mxu0 0.0
    %302 = vmatpush1.msra.mxu0 0.0
    %303 = vmatprep.subr.mxu0 0.0
    %304 = vmatpush1.msra.mxu0 0.0
    %305 = vmatprep.subr.mxu0 0.0
    %306 = vmatpush1.msra.mxu0 0.0
    %307 = vmatprep.subr.mxu0 0.0
    %308 = vmatpush1.msra.mxu0 0.0
    %309 = vmatprep.subr.mxu0 0.0
    %310 = vmatpush1.msra.mxu0 0.0
    %311 = vmatprep.subr.mxu0 0.0
    %312 = vmatpush1.msra.mxu0 0.0
    %313 = vmatprep.subr.mxu0 0.0
    %314 = vmatpush1.msra.mxu0 0.0
    %315 = vmatprep.subr.mxu0 0.0
    %316 = vmatpush1.msra.mxu0 0.0
    %317 = vmatprep.subr.mxu0 0.0
    %318 = vmatpush1.msra.mxu0 0.0
    %319 = vmatprep.subr.mxu0 0.0
    %320 = vmatpush1.msra.mxu0 0.0
    %321 = vmatprep.subr.mxu0 0.0
    %322 = vmatpush1.msra.mxu0 0.0
    %323 = vmatprep.mubr.f32.mxu0 0.0
    %324 = vmatmul.mubr.f32.gmra.mrb[0].mxu0 %v257
    %v325 = vpop.f32.mrb[0].mxu0
    %v326 = vadd.f32 %v255, %v325
    %v327 = vpop.f32.mrb[0].mxu0
    %328 = vdwg.mxu0
    %v329 = vmul.f32 %v326, 0.5
    %v330 = vmul.f32 %v326, %v326
    %v331 = vmul.f32 %v326, %v330
    %v332 = vmul.f32 %v331, 0.044715
    %v333 = vadd.f32 %v326, %v332
    %v334 = vmul.f32 %v333, 0.7978846
    %v335 = vtanh.pop %v334
    %v336 = vadd.f32 %v335, 1.0
    %v337 = vmul.f32 %v329, %v336
    %v338 = vld [vmem:[#allocation5 + $0xa8] sm:$0xff]
    %v339 = vld [vmem:[#allocation5 + $0xb0] sm:$0xff]
    %v340 = vld [vmem:[#allocation5 + $0xb8] sm:$0xff]
    %v341 = vld [vmem:[#allocation5 + $0xc0] sm:$0xff]
    %v342 = vld [vmem:[#allocation5 + $0xc8] sm:$0xff]
    %v343 = vld [vmem:[#allocation5 + $0xd0] sm:$0xff]
    %v344 = vld [vmem:[#allocation5 + $0xd8] sm:$0xff]
    %v345 = vld [vmem:[#allocation5 + $0xe0] sm:$0xff]
    %v346 = vld [vmem:[#allocation5 + $0xe8] sm:$0xff]
    %v347 = vld [vmem:[#allocation5 + $0xf0] sm:$0xff]
    %v348 = vld [vmem:[#allocation5 + $0xf8] sm:$0xff]
    %v349 = vld [vmem:[#allocation5 + $0x100] sm:$0xff]
    %v350 = vld [vmem:[#allocation5 + $0x108] sm:$0xff]
    %v351 = vld [vmem:[#allocation5 + $0x110] sm:$0xff]
    %v352 = vld [vmem:[#allocation5 + $0x118] sm:$0xff]
    %v353 = vld [vmem:[#allocation5 + $0x120] sm:$0xff]
    %354 = vmatprep.subr.mxu0 0.0
    %355 = vmatpush1.msra.mxu0 %v338
    %356 = vmatprep.subr.mxu0 0.0
    %357 = vmatpush1.msra.mxu0 %v339
    %358 = vmatprep.subr.mxu0 0.0
    %359 = vmatpush1.msra.mxu0 %v340
    %360 = vmatprep.subr.mxu0 0.0
    %361 = vmatpush1.msra.mxu0 %v341
    %362 = vmatprep.subr.mxu0 0.0
    %363 = vmatpush1.msra.mxu0 %v342
    %364 = vmatprep.subr.mxu0 0.0
    %365 = vmatpush1.msra.mxu0 %v343
    %366 = vmatprep.subr.mxu0 0.0
    %367 = vmatpush1.msra.mxu0 %v344
    %368 = vmatprep.subr.mxu0 0.0
    %369 = vmatpush1.msra.mxu0 %v345
    %370 = vmatprep.subr.mxu0 0.0
    %371 = vmatpush1.msra.mxu0 %v346
    %372 = vmatprep.subr.mxu0 0.0
    %373 = vmatpush1.msra.mxu0 %v347
    %374 = vmatprep.subr.mxu0 0.0
    %375 = vmatpush1.msra.mxu0 %v348
    %376 = vmatprep.subr.mxu0 0.0
    %377 = vmatpush1.msra.mxu0 %v349
    %378 = vmatprep.subr.mxu0 0.0
    %379 = vmatpush1.msra.mxu0 %v350
    %380 = vmatprep.subr.mxu0 0.0
    %381 = vmatpush1.msra.mxu0 %v351
    %382 = vmatprep.subr.mxu0 0.0
    %383 = vmatpush1.msra.mxu0 %v352
    %384 = vmatprep.subr.mxu0 0.0
    %385 = vmatpush1.msra.mxu0 %v353
    %386 = vmatprep.subr.mxu0 0.0
    %387 = vmatpush1.msra.mxu0 0.0
    %388 = vmatprep.subr.mxu0 0.0
    %389 = vmatpush1.msra.mxu0 0.0
    %390 = vmatprep.subr.mxu0 0.0
    %391 = vmatpush1.msra.mxu0 0.0
    %392 = vmatprep.subr.mxu0 0.0
    %393 = vmatpush1.msra.mxu0 0.0
    %394 = vmatprep.subr.mxu0 0.0
    %395 = vmatpush1.msra.mxu0 0.0
    %396 = vmatprep.subr.mxu0 0.0
    %397 = vmatpush1.msra.mxu0 0.0
    %398 = vmatprep.subr.mxu0 0.0
    %399 = vmatpush1.msra.mxu0 0.0
    %400 = vmatprep.subr.mxu0 0.0
    %401 = vmatpush1.msra.mxu0 0.0
    %402 = vmatprep.subr.mxu0 0.0
    %403 = vmatpush1.msra.mxu0 0.0
    %404 = vmatprep.subr.mxu0 0.0
    %405 = vmatpush1.msra.mxu0 0.0
    %406 = vmatprep.subr.mxu0 0.0
    %407 = vmatpush1.msra.mxu0 0.0
    %408 = vmatprep.subr.mxu0 0.0
    %409 = vmatpush1.msra.mxu0 0.0
    %410 = vmatprep.subr.mxu0 0.0
    %411 = vmatpush1.msra.mxu0 0.0
    %412 = vmatprep.subr.mxu0 0.0
    %413 = vmatpush1.msra.mxu0 0.0
    %414 = vmatprep.subr.mxu0 0.0
    %415 = vmatpush1.msra.mxu0 0.0
    %416 = vmatprep.subr.mxu0 0.0
    %417 = vmatpush1.msra.mxu0 0.0
    %418 = vmatprep.mubr.f32.mxu0 0.0
    %419 = vmatmul.mubr.f32.gmra.mrb[0].mxu0 %v337
    %v420 = vpop.f32.mrb[0].mxu0
    %v421 = vadd.f32 0.0, %v420
    %v422 = vpop.f32.mrb[0].mxu0
    %423 = vdwg.mxu0
    %v424 = vadd.f32 %v233, %v421
    %v425 = vld [vmem:[#allocation7 + $0x9] sm:$0x1]
    %v426 = vlaneseq
    %v427 = vshrl.u32 %v426, 7
    %v428 = vsub.s32 0, %v427
    %v429 = vrot.slane %v425, %v428
    %v430 = vadd.f32 %v424, %v429
    %v431 = vsel %vm135, %v430, 0.0
    %432 = vadd.xlane.f32.xlu0 %v431
    %v433 = vpop.xlane.xlu0 %432
    %v434 = vmul.f32 %v433, %v139
    %v435 = vsub.f32 %v430, %v434
    %v436 = vmul.f32 %v435, %v435
    %v437 = vsel %vm135, %v436, 0.0
    %438 = vadd.xlane.f32.xlu0 %v437
    %v439 = vpop.xlane.xlu0 %438
    %v440 = vmul.f32 %v439, %v139
    %v441 = vadd.f32 %v440, 1e-05
    %v442 = vrsqrt.pop %v441
    %v443 = vmul.f32 %v435, %v442
    %448 = vrot.lane.b32.xlu0 %v150, 96
    %v449 = vpop.permute.xlu0 %448
    %450 = vrot.lane.b32.xlu0 %v151, 96
    %v451 = vpop.permute.xlu0 %450
    %452 = vrot.lane.b32.xlu0 %v152, 96
    %v453 = vpop.permute.xlu0 %452
    %454 = vrot.lane.b32.xlu0 %v153, 96
    %v455 = vpop.permute.xlu0 %454
    %v461 = vsel %vm135, %v443, 0
    %463 = vmatprep.subr.mxu0 0.0
    %464 = vmatpush1.msra.mxu0 %v449
    %465 = vmatprep.subr.mxu0 0.0
    %466 = vmatpush1.msra.mxu0 %v451
    %467 = vmatprep.subr.mxu0 0.0
    %468 = vmatpush1.msra.mxu0 %v453
    %469 = vmatprep.subr.mxu0 0.0
    %470 = vmatpush1.msra.mxu0 %v455
    %471 = vmatprep.subr.mxu0 0.0
    %472 = vmatpush1.msra.mxu0 0.0
    %473 = vmatprep.subr.mxu0 0.0
    %474 = vmatpush1.msra.mxu0 0.0
    %475 = vmatprep.subr.mxu0 0.0
    %476 = vmatpush1.msra.mxu0 0.0
    %477 = vmatprep.subr.mxu0 0.0
    %478 = vmatpush1.msra.mxu0 0.0
    %479 = vmatprep.subr.mxu0 0.0
    %480 = vmatpush1.msra.mxu0 0.0
    %481 = vmatprep.subr.mxu0 0.0
    %482 = vmatpush1.msra.mxu0 0.0
    %483 = vmatprep.subr.mxu0 0.0
    %484 = vmatpush1.msra.mxu0 0.0
    %485 = vmatprep.subr.mxu0 0.0
    %486 = vmatpush1.msra.mxu0 0.0
    %487 = vmatprep.subr.mxu0 0.0
    %488 = vmatpush1.msra.mxu0 0.0
    %489 = vmatprep.subr.mxu0 0.0
    %490 = vmatpush1.msra.mxu0 0.0
    %491 = vmatprep.subr.mxu0 0.0
    %492 = vmatpush1.msra.mxu0 0.0
    %493 = vmatprep.subr.mxu0 0.0
    %494 = vmatpush1.msra.mxu0 0.0
    %495 = vmatprep.subr.mxu0 0.0
    %496 = vmatpush1.msra.mxu0 0.0
    %497 = vmatprep.subr.mxu0 0.0
    %498 = vmatpush1.msra.mxu0 0.0
    %499 = vmatprep.subr.mxu0 0.0
    %500 = vmatpush1.msra.mxu0 0.0
    %501 = vmatprep.subr.mxu0 0.0
    %502 = vmatpush1.msra.mxu0 0.0
    %503 = vmatprep.subr.mxu0 0.0
    %504 = vmatpush1.msra.mxu0 0.0
    %505 = vmatprep.subr.mxu0 0.0
    %506 = vmatpush1.msra.mxu0 0.0
    %507 = vmatprep.subr.mxu0 0.0
    %508 = vmatpush1.msra.mxu0 0.0
    %509 = vmatprep.subr.mxu0 0.0
    %510 = vmatpush1.msra.mxu0 0.0
    %511 = vmatprep.subr.mxu0 0.0
    %512 = vmatpush1.msra.mxu0 0.0
    %513 = vmatprep.subr.mxu0 0.0
    %514 = vmatpush1.msra.mxu0 0.0
    %515 = vmatprep.subr.mxu0 0.0
    %516 = vmatpush1.msra.mxu0 0.0
    %517 = vmatprep.subr.mxu0 0.0
    %518 = vmatpush1.msra.mxu0 0.0
    %519 = vmatprep.subr.mxu0 0.0
    %520 = vmatpush1.msra.mxu0 0.0
    %521 = vmatprep.subr.mxu0 0.0
    %522 = vmatpush1.msra.mxu0 0.0
    %523 = vmatprep.subr.mxu0 0.0
    %524 = vmatpush1.msra.mxu0 0.0
    %525 = vmatprep.subr.mxu0 0.0
    %526 = vmatpush1.msra.mxu0 0.0
    %527 = vmatprep.mubr.f32.mxu0 0.0
    %528 = vmatmul.mubr.f32.gmra.mrb[0].mxu0 %v461
    %v529 = vpop.f32.mrb[0].mxu0
    %v530 = vadd.f32 0.0, %v529
    %v531 = vpop.f32.mrb[0].mxu0
    %532 = vdwg.mxu0
    %v533 = vadd.f32 %v430, %v530
    %v534 = vld [vmem:[#allocation7 + $0x2] sm:$0x1]
    %v535 = vlaneseq
    %v536 = vshrl.u32 %v535, 7
    %v537 = vsub.s32 0, %v536
    %v538 = vrot.slane %v534, %v537
    %v539 = vadd.f32 %v533, %v538
    %v540 = vsel %vm135, %v539, 0.0
    %541 = vadd.xlane.f32.xlu0 %v540
    %v542 = vpop.xlane.xlu0 %541
    %v543 = vmul.f32 %v542, %v139
    %v544 = vsub.f32 %v539, %v543
    %v545 = vmul.f32 %v544, %v544
    %v546 = vsel %vm135, %v545, 0.0
    %547 = vadd.xlane.f32.xlu0 %v546
    %v548 = vpop.xlane.xlu0 %547
    %v549 = vmul.f32 %v548, %v139
    %v550 = vadd.f32 %v549, 1e-05
    %v551 = vrsqrt.pop %v550
    %v552 = vmul.f32 %v544, %v551
    %v553 = vld [vmem:[#allocation5 + $0x48] sm:$0xff]
    %v554 = vld [vmem:[#allocation5 + $0x50] sm:$0xff]
    %v555 = vld [vmem:[#allocation5 + $0x58] sm:$0xff]
    %v556 = vld [vmem:[#allocation5 + $0x60] sm:$0xff]
    %v557 = vld [vmem:[#allocation7 + $0x6] sm:$0x1]
    %v558 = vlaneseq
    %v559 = vshrl.u32 %v558, 7
    %v560 = vsub.s32 0, %v559
    %v561 = vrot.slane %v557, %v560
    %v563 = vsel %vm135, %v552, 0
    %565 = vmatprep.subr.mxu0 0.0
    %566 = vmatpush1.msra.mxu0 %v553
    %567 = vmatprep.subr.mxu0 0.0
    %568 = vmatpush1.msra.mxu0 %v554
    %569 = vmatprep.subr.mxu0 0.0
    %570 = vmatpush1.msra.mxu0 %v555
    %571 = vmatprep.subr.mxu0 0.0
    %572 = vmatpush1.msra.mxu0 %v556
    %573 = vmatprep.subr.mxu0 0.0
    %574 = vmatpush1.msra.mxu0 0.0
    %575 = vmatprep.subr.mxu0 0.0
    %576 = vmatpush1.msra.mxu0 0.0
    %577 = vmatprep.subr.mxu0 0.0
    %578 = vmatpush1.msra.mxu0 0.0
    %579 = vmatprep.subr.mxu0 0.0
    %580 = vmatpush1.msra.mxu0 0.0
    %581 = vmatprep.subr.mxu0 0.0
    %582 = vmatpush1.msra.mxu0 0.0
    %583 = vmatprep.subr.mxu0 0.0
    %584 = vmatpush1.msra.mxu0 0.0
    %585 = vmatprep.subr.mxu0 0.0
    %586 = vmatpush1.msra.mxu0 0.0
    %587 = vmatprep.subr.mxu0 0.0
    %588 = vmatpush1.msra.mxu0 0.0
    %589 = vmatprep.subr.mxu0 0.0
    %590 = vmatpush1.msra.mxu0 0.0
    %591 = vmatprep.subr.mxu0 0.0
    %592 = vmatpush1.msra.mxu0 0.0
    %593 = vmatprep.subr.mxu0 0.0
    %594 = vmatpush1.msra.mxu0 0.0
    %595 = vmatprep.subr.mxu0 0.0
    %596 = vmatpush1.msra.mxu0 0.0
    %597 = vmatprep.subr.mxu0 0.0
    %598 = vmatpush1.msra.mxu0 0.0
    %599 = vmatprep.subr.mxu0 0.0
    %600 = vmatpush1.msra.mxu0 0.0
    %601 = vmatprep.subr.mxu0 0.0
    %602 = vmatpush1.msra.mxu0 0.0
    %603 = vmatprep.subr.mxu0 0.0
    %604 = vmatpush1.msra.mxu0 0.0
    %605 = vmatprep.subr.mxu0 0.0
    %606 = vmatpush1.msra.mxu0 0.0
    %607 = vmatprep.subr.mxu0 0.0
    %608 = vmatpush1.msra.mxu0 0.0
    %609 = vmatprep.subr.mxu0 0.0
    %610 = vmatpush1.msra.mxu0 0.0
    %611 = vmatprep.subr.mxu0 0.0
    %612 = vmatpush1.msra.mxu0 0.0
    %613 = vmatprep.subr.mxu0 0.0
    %614 = vmatpush1.msra.mxu0 0.0
    %615 = vmatprep.subr.mxu0 0.0
    %616 = vmatpush1.msra.mxu0 0.0
    %617 = vmatprep.subr.mxu0 0.0
    %618 = vmatpush1.msra.mxu0 0.0
    %619 = vmatprep.subr.mxu0 0.0
    %620 = vmatpush1.msra.mxu0 0.0
    %621 = vmatprep.subr.mxu0 0.0
    %622 = vmatpush1.msra.mxu0 0.0
    %623 = vmatprep.subr.mxu0 0.0
    %624 = vmatpush1.msra.mxu0 0.0
    %625 = vmatprep.subr.mxu0 0.0
    %626 = vmatpush1.msra.mxu0 0.0
    %627 = vmatprep.subr.mxu0 0.0
    %628 = vmatpush1.msra.mxu0 0.0
    %629 = vmatprep.mubr.f32.mxu0 0.0
    %630 = vmatmul.mubr.f32.gmra.mrb[0].mxu0 %v563
    %v631 = vpop.f32.mrb[0].mxu0
    %v632 = vadd.f32 %v561, %v631
    %v633 = vpop.f32.mrb[0].mxu0
    %634 = vdwg.mxu0
    %v635 = vmul.f32 %v632, 0.5
    %v636 = vmul.f32 %v632, %v632
    %v637 = vmul.f32 %v632, %v636
    %v638 = vmul.f32 %v637, 0.044715
    %v639 = vadd.f32 %v632, %v638
    %v640 = vmul.f32 %v639, 0.7978846
    %v641 = vtanh.pop %v640
    %v642 = vadd.f32 %v641, 1.0
    %v643 = vmul.f32 %v635, %v642
    %660 = vrot.lane.b32.xlu0 %v338, 96
    %v661 = vpop.permute.xlu0 %660
    %662 = vrot.lane.b32.xlu0 %v339, 96
    %v663 = vpop.permute.xlu0 %662
    %664 = vrot.lane.b32.xlu0 %v340, 96
    %v665 = vpop.permute.xlu0 %664
    %666 = vrot.lane.b32.xlu0 %v341, 96
    %v667 = vpop.permute.xlu0 %666
    %668 = vrot.lane.b32.xlu0 %v342, 96
    %v669 = vpop.permute.xlu0 %668
    %670 = vrot.lane.b32.xlu0 %v343, 96
    %v671 = vpop.permute.xlu0 %670
    %672 = vrot.lane.b32.xlu0 %v344, 96
    %v673 = vpop.permute.xlu0 %672
    %674 = vrot.lane.b32.xlu0 %v345, 96
    %v675 = vpop.permute.xlu0 %674
    %676 = vrot.lane.b32.xlu0 %v346, 96
    %v677 = vpop.permute.xlu0 %676
    %678 = vrot.lane.b32.xlu0 %v347, 96
    %v679 = vpop.permute.xlu0 %678
    %680 = vrot.lane.b32.xlu0 %v348, 96
    %v681 = vpop.permute.xlu0 %680
    %682 = vrot.lane.b32.xlu0 %v349, 96
    %v683 = vpop.permute.xlu0 %682
    %684 = vrot.lane.b32.xlu0 %v350, 96
    %v685 = vpop.permute.xlu0 %684
    %686 = vrot.lane.b32.xlu0 %v351, 96
    %v687 = vpop.permute.xlu0 %686
    %688 = vrot.lane.b32.xlu0 %v352, 96
    %v689 = vpop.permute.xlu0 %688
    %690 = vrot.lane.b32.xlu0 %v353, 96
    %v691 = vpop.permute.xlu0 %690
    %708 = vmatprep.subr.mxu0 0.0
    %709 = vmatpush1.msra.mxu0 %v661
    %710 = vmatprep.subr.mxu0 0.0
    %711 = vmatpush1.msra.mxu0 %v663
    %712 = vmatprep.subr.mxu0 0.0
    %713 = vmatpush1.msra.mxu0 %v665
    %714 = vmatprep.subr.mxu0 0.0
    %715 = vmatpush1.msra.mxu0 %v667
    %716 = vmatprep.subr.mxu0 0.0
    %717 = vmatpush1.msra.mxu0 %v669
    %718 = vmatprep.subr.mxu0 0.0
    %719 = vmatpush1.msra.mxu0 %v671
    %720 = vmatprep.subr.mxu0 0.0
    %721 = vmatpush1.msra.mxu0 %v673
    %722 = vmatprep.subr.mxu0 0.0
    %723 = vmatpush1.msra.mxu0 %v675
    %724 = vmatprep.subr.mxu0 0.0
    %725 = vmatpush1.msra.mxu0 %v677
    %726 = vmatprep.subr.mxu0 0.0
    %727 = vmatpush1.msra.mxu0 %v679
    %728 = vmatprep.subr.mxu0 0.0
    %729 = vmatpush1.msra.mxu0 %v681
    %730 = vmatprep.subr.mxu0 0.0
    %731 = vmatpush1.msra.mxu0 %v683
    %732 = vmatprep.subr.mxu0 0.0
    %733 = vmatpush1.msra.mxu0 %v685
    %734 = vmatprep.subr.mxu0 0.0
    %735 = vmatpush1.msra.mxu0 %v687
    %736 = vmatprep.subr.mxu0 0.0
    %737 = vmatpush1.msra.mxu0 %v689
    %738 = vmatprep.subr.mxu0 0.0
    %739 = vmatpush1.msra.mxu0 %v691
    %740 = vmatprep.subr.mxu0 0.0
    %741 = vmatpush1.msra.mxu0 0.0
    %742 = vmatprep.subr.mxu0 0.0
    %743 = vmatpush1.msra.mxu0 0.0
    %744 = vmatprep.subr.mxu0 0.0
    %745 = vmatpush1.msra.mxu0 0.0
    %746 = vmatprep.subr.mxu0 0.0
    %747 = vmatpush1.msra.mxu0 0.0
    %748 = vmatprep.subr.mxu0 0.0
    %749 = vmatpush1.msra.mxu0 0.0
    %750 = vmatprep.subr.mxu0 0.0
    %751 = vmatpush1.msra.mxu0 0.0
    %752 = vmatprep.subr.mxu0 0.0
    %753 = vmatpush1.msra.mxu0 0.0
    %754 = vmatprep.subr.mxu0 0.0
    %755 = vmatpush1.msra.mxu0 0.0
    %756 = vmatprep.subr.mxu0 0.0
    %757 = vmatpush1.msra.mxu0 0.0
    %758 = vmatprep.subr.mxu0 0.0
    %759 = vmatpush1.msra.mxu0 0.0
    %760 = vmatprep.subr.mxu0 0.0
    %761 = vmatpush1.msra.mxu0 0.0
    %762 = vmatprep.subr.mxu0 0.0
    %763 = vmatpush1.msra.mxu0 0.0
    %764 = vmatprep.subr.mxu0 0.0
    %765 = vmatpush1.msra.mxu0 0.0
    %766 = vmatprep.subr.mxu0 0.0
    %767 = vmatpush1.msra.mxu0 0.0
    %768 = vmatprep.subr.mxu0 0.0
    %769 = vmatpush1.msra.mxu0 0.0
    %770 = vmatprep.subr.mxu0 0.0
    %771 = vmatpush1.msra.mxu0 0.0
    %772 = vmatprep.mubr.f32.mxu0 0.0
    %773 = vmatmul.mubr.f32.gmra.mrb[0].mxu0 %v643
    %v774 = vpop.f32.mrb[0].mxu0
    %v775 = vadd.f32 0.0, %v774
    %v776 = vpop.f32.mrb[0].mxu0
    %777 = vdwg.mxu0
    %v778 = vadd.f32 %v539, %v775
    %v779 = vld [vmem:[#allocation7 + $0xa] sm:$0x1]
    %v780 = vlaneseq
    %v781 = vshrl.u32 %v780, 7
    %v782 = vsub.s32 0, %v781
    %v783 = vrot.slane %v779, %v782
    %v784 = vadd.f32 %v778, %v783
    %v785 = vsel %vm135, %v784, 0.0
    %786 = vadd.xlane.f32.xlu0 %v785
    %v787 = vpop.xlane.xlu0 %786
    %v788 = vmul.f32 %v787, %v139
    %v789 = vsub.f32 %v784, %v788
    %v790 = vmul.f32 %v789, %v789
    %v791 = vsel %vm135, %v790, 0.0
    %792 = vadd.xlane.f32.xlu0 %v791
    %v793 = vpop.xlane.xlu0 %792
    %v794 = vmul.f32 %v793, %v139
    %v795 = vadd.f32 %v794, 1e-05
    %v796 = vrsqrt.pop %v795
    %v797 = vmul.f32 %v789, %v796
    %798 = vrot.lane.b32.xlu0 %v150, 64
    %v799 = vpop.permute.xlu0 %798
    %800 = vrot.lane.b32.xlu0 %v151, 64
    %v801 = vpop.permute.xlu0 %800
    %802 = vrot.lane.b32.xlu0 %v152, 64
    %v803 = vpop.permute.xlu0 %802
    %804 = vrot.lane.b32.xlu0 %v153, 64
    %v805 = vpop.permute.xlu0 %804
    %v811 = vsel %vm135, %v797, 0
    %813 = vmatprep.subr.mxu0 0.0
    %814 = vmatpush1.msra.mxu0 %v799
    %815 = vmatprep.subr.mxu0 0.0
    %816 = vmatpush1.msra.mxu0 %v801
    %817 = vmatprep.subr.mxu0 0.0
    %818 = vmatpush1.msra.mxu0 %v803
    %819 = vmatprep.subr.mxu0 0.0
    %820 = vmatpush1.msra.mxu0 %v805
    %821 = vmatprep.subr.mxu0 0.0
    %822 = vmatpush1.msra.mxu0 0.0
    %823 = vmatprep.subr.mxu0 0.0
    %824 = vmatpush1.msra.mxu0 0.0
    %825 = vmatprep.subr.mxu0 0.0
    %826 = vmatpush1.msra.mxu0 0.0
    %827 = vmatprep.subr.mxu0 0.0
    %828 = vmatpush1.msra.mxu0 0.0
    %829 = vmatprep.subr.mxu0 0.0
    %830 = vmatpush1.msra.mxu0 0.0
    %831 = vmatprep.subr.mxu0 0.0
    %832 = vmatpush1.msra.mxu0 0.0
    %833 = vmatprep.subr.mxu0 0.0
    %834 = vmatpush1.msra.mxu0 0.0
    %835 = vmatprep.subr.mxu0 0.0
    %836 = vmatpush1.msra.mxu0 0.0
    %837 = vmatprep.subr.mxu0 0.0
    %838 = vmatpush1.msra.mxu0 0.0
    %839 = vmatprep.subr.mxu0 0.0
    %840 = vmatpush1.msra.mxu0 0.0
    %841 = vmatprep.subr.mxu0 0.0
    %842 = vmatpush1.msra.mxu0 0.0
    %843 = vmatprep.subr.mxu0 0.0
    %844 = vmatpush1.msra.mxu0 0.0
    %845 = vmatprep.subr.mxu0 0.0
    %846 = vmatpush1.msra.mxu0 0.0
    %847 = vmatprep.subr.mxu0 0.0
    %848 = vmatpush1.msra.mxu0 0.0
    %849 = vmatprep.subr.mxu0 0.0
    %850 = vmatpush1.msra.mxu0 0.0
    %851 = vmatprep.subr.mxu0 0.0
    %852 = vmatpush1.msra.mxu0 0.0
    %853 = vmatprep.subr.mxu0 0.0
    %854 = vmatpush1.msra.mxu0 0.0
    %855 = vmatprep.subr.mxu0 0.0
    %856 = vmatpush1.msra.mxu0 0.0
    %857 = vmatprep.subr.mxu0 0.0
    %858 = vmatpush1.msra.mxu0 0.0
    %859 = vmatprep.subr.mxu0 0.0
    %860 = vmatpush1.msra.mxu0 0.0
    %861 = vmatprep.subr.mxu0 0.0
    %862 = vmatpush1.msra.mxu0 0.0
    %863 = vmatprep.subr.mxu0 0.0
    %864 = vmatpush1.msra.mxu0 0.0
    %865 = vmatprep.subr.mxu0 0.0
    %866 = vmatpush1.msra.mxu0 0.0
    %867 = vmatprep.subr.mxu0 0.0
    %868 = vmatpush1.msra.mxu0 0.0
    %869 = vmatprep.subr.mxu0 0.0
    %870 = vmatpush1.msra.mxu0 0.0
    %871 = vmatprep.subr.mxu0 0.0
    %872 = vmatpush1.msra.mxu0 0.0
    %873 = vmatprep.subr.mxu0 0.0
    %874 = vmatpush1.msra.mxu0 0.0
    %875 = vmatprep.subr.mxu0 0.0
    %876 = vmatpush1.msra.mxu0 0.0
    %877 = vmatprep.mubr.f32.mxu0 0.0
    %878 = vmatmul.mubr.f32.gmra.mrb[0].mxu0 %v811
    %v879 = vpop.f32.mrb[0].mxu0
    %v880 = vadd.f32 0.0, %v879
    %v881 = vpop.f32.mrb[0].mxu0
    %882 = vdwg.mxu0
    %v883 = vadd.f32 %v784, %v880
    %v884 = vld [vmem:[#allocation7 + $0x3] sm:$0x1]
    %v885 = vlaneseq
    %v886 = vshrl.u32 %v885, 7
    %v887 = vsub.s32 0, %v886
    %v888 = vrot.slane %v884, %v887
    %v889 = vadd.f32 %v883, %v888
    %v890 = vsel %vm135, %v889, 0.0
    %891 = vadd.xlane.f32.xlu0 %v890
    %v892 = vpop.xlane.xlu0 %891
    %v893 = vmul.f32 %v892, %v139
    %v894 = vsub.f32 %v889, %v893
    %v895 = vmul.f32 %v894, %v894
    %v896 = vsel %vm135, %v895, 0.0
    %897 = vadd.xlane.f32.xlu0 %v896
    %v898 = vpop.xlane.xlu0 %897
    %v899 = vmul.f32 %v898, %v139
    %v900 = vadd.f32 %v899, 1e-05
    %v901 = vrsqrt.pop %v900
    %v902 = vmul.f32 %v894, %v901
    %v903 = vld [vmem:[#allocation5 + $0x68] sm:$0xff]
    %v904 = vld [vmem:[#allocation5 + $0x70] sm:$0xff]
    %v905 = vld [vmem:[#allocation5 + $0x78] sm:$0xff]
    %v906 = vld [vmem:[#allocation5 + $0x80] sm:$0xff]
    %v907 = vld [vmem:[#allocation7 + $0x7] sm:$0x1]
    %v908 = vlaneseq
    %v909 = vshrl.u32 %v908, 7
    %v910 = vsub.s32 0, %v909
    %v911 = vrot.slane %v907, %v910
    %v913 = vsel %vm135, %v902, 0
    %915 = vmatprep.subr.mxu0 0.0
    %916 = vmatpush1.msra.mxu0 %v903
    %917 = vmatprep.subr.mxu0 0.0
    %918 = vmatpush1.msra.mxu0 %v904
    %919 = vmatprep.subr.mxu0 0.0
    %920 = vmatpush1.msra.mxu0 %v905
    %921 = vmatprep.subr.mxu0 0.0
    %922 = vmatpush1.msra.mxu0 %v906
    %923 = vmatprep.subr.mxu0 0.0
    %924 = vmatpush1.msra.mxu0 0.0
    %925 = vmatprep.subr.mxu0 0.0
    %926 = vmatpush1.msra.mxu0 0.0
    %927 = vmatprep.subr.mxu0 0.0
    %928 = vmatpush1.msra.mxu0 0.0
    %929 = vmatprep.subr.mxu0 0.0
    %930 = vmatpush1.msra.mxu0 0.0
    %931 = vmatprep.subr.mxu0 0.0
    %932 = vmatpush1.msra.mxu0 0.0
    %933 = vmatprep.subr.mxu0 0.0
    %934 = vmatpush1.msra.mxu0 0.0
    %935 = vmatprep.subr.mxu0 0.0
    %936 = vmatpush1.msra.mxu0 0.0
    %937 = vmatprep.subr.mxu0 0.0
    %938 = vmatpush1.msra.mxu0 0.0
    %939 = vmatprep.subr.mxu0 0.0
    %940 = vmatpush1.msra.mxu0 0.0
    %941 = vmatprep.subr.mxu0 0.0
    %942 = vmatpush1.msra.mxu0 0.0
    %943 = vmatprep.subr.mxu0 0.0
    %944 = vmatpush1.msra.mxu0 0.0
    %945 = vmatprep.subr.mxu0 0.0
    %946 = vmatpush1.msra.mxu0 0.0
    %947 = vmatprep.subr.mxu0 0.0
    %948 = vmatpush1.msra.mxu0 0.0
    %949 = vmatprep.subr.mxu0 0.0
    %950 = vmatpush1.msra.mxu0 0.0
    %951 = vmatprep.subr.mxu0 0.0
    %952 = vmatpush1.msra.mxu0 0.0
    %953 = vmatprep.subr.mxu0 0.0
    %954 = vmatpush1.msra.mxu0 0.0
    %955 = vmatprep.subr.mxu0 0.0
    %956 = vmatpush1.msra.mxu0 0.0
    %957 = vmatprep.subr.mxu0 0.0
    %958 = vmatpush1.msra.mxu0 0.0
    %959 = vmatprep.subr.mxu0 0.0
    %960 = vmatpush1.msra.mxu0 0.0
    %961 = vmatprep.subr.mxu0 0.0
    %962 = vmatpush1.msra.mxu0 0.0
    %963 = vmatprep.subr.mxu0 0.0
    %964 = vmatpush1.msra.mxu0 0.0
    %965 = vmatprep.subr.mxu0 0.0
    %966 = vmatpush1.msra.mxu0 0.0
    %967 = vmatprep.subr.mxu0 0.0
    %968 = vmatpush1.msra.mxu0 0.0
    %969 = vmatprep.subr.mxu0 0.0
    %970 = vmatpush1.msra.mxu0 0.0
    %971 = vmatprep.subr.mxu0 0.0
    %972 = vmatpush1.msra.mxu0 0.0
    %973 = vmatprep.subr.mxu0 0.0
    %974 = vmatpush1.msra.mxu0 0.0
    %975 = vmatprep.subr.mxu0 0.0
    %976 = vmatpush1.msra.mxu0 0.0
    %977 = vmatprep.subr.mxu0 0.0
    %978 = vmatpush1.msra.mxu0 0.0
    %979 = vmatprep.mubr.f32.mxu0 0.0
    %980 = vmatmul.mubr.f32.gmra.mrb[0].mxu0 %v913
    %v981 = vpop.f32.mrb[0].mxu0
    %v982 = vadd.f32 %v911, %v981
    %v983 = vpop.f32.mrb[0].mxu0
    %984 = vdwg.mxu0
    %v985 = vmul.f32 %v982, 0.5
    %v986 = vmul.f32 %v982, %v982
    %v987 = vmul.f32 %v982, %v986
    %v988 = vmul.f32 %v987, 0.044715
    %v989 = vadd.f32 %v982, %v988
    %v990 = vmul.f32 %v989, 0.7978846
    %v991 = vtanh.pop %v990
    %v992 = vadd.f32 %v991, 1.0
    %v993 = vmul.f32 %v985, %v992
    %994 = vrot.lane.b32.xlu0 %v338, 64
    %v995 = vpop.permute.xlu0 %994
    %996 = vrot.lane.b32.xlu0 %v339, 64
    %v997 = vpop.permute.xlu0 %996
    %998 = vrot.lane.b32.xlu0 %v340, 64
    %v999 = vpop.permute.xlu0 %998
    %1000 = vrot.lane.b32.xlu0 %v341, 64
    %v1001 = vpop.permute.xlu0 %1000
    %1002 = vrot.lane.b32.xlu0 %v342, 64
    %v1003 = vpop.permute.xlu0 %1002
    %1004 = vrot.lane.b32.xlu0 %v343, 64
    %v1005 = vpop.permute.xlu0 %1004
    %1006 = vrot.lane.b32.xlu0 %v344, 64
    %v1007 = vpop.permute.xlu0 %1006
    %1008 = vrot.lane.b32.xlu0 %v345, 64
    %v1009 = vpop.permute.xlu0 %1008
    %1010 = vrot.lane.b32.xlu0 %v346, 64
    %v1011 = vpop.permute.xlu0 %1010
    %1012 = vrot.lane.b32.xlu0 %v347, 64
    %v1013 = vpop.permute.xlu0 %1012
    %1014 = vrot.lane.b32.xlu0 %v348, 64
    %v1015 = vpop.permute.xlu0 %1014
    %1016 = vrot.lane.b32.xlu0 %v349, 64
    %v1017 = vpop.permute.xlu0 %1016
    %1018 = vrot.lane.b32.xlu0 %v350, 64
    %v1019 = vpop.permute.xlu0 %1018
    %1020 = vrot.lane.b32.xlu0 %v351, 64
    %v1021 = vpop.permute.xlu0 %1020
    %1022 = vrot.lane.b32.xlu0 %v352, 64
    %v1023 = vpop.permute.xlu0 %1022
    %1024 = vrot.lane.b32.xlu0 %v353, 64
    %v1025 = vpop.permute.xlu0 %1024
    %1042 = vmatprep.subr.mxu0 0.0
    %1043 = vmatpush1.msra.mxu0 %v995
    %1044 = vmatprep.subr.mxu0 0.0
    %1045 = vmatpush1.msra.mxu0 %v997
    %1046 = vmatprep.subr.mxu0 0.0
    %1047 = vmatpush1.msra.mxu0 %v999
    %1048 = vmatprep.subr.mxu0 0.0
    %1049 = vmatpush1.msra.mxu0 %v1001
    %1050 = vmatprep.subr.mxu0 0.0
    %1051 = vmatpush1.msra.mxu0 %v1003
    %1052 = vmatprep.subr.mxu0 0.0
    %1053 = vmatpush1.msra.mxu0 %v1005
    %1054 = vmatprep.subr.mxu0 0.0
    %1055 = vmatpush1.msra.mxu0 %v1007
    %1056 = vmatprep.subr.mxu0 0.0
    %1057 = vmatpush1.msra.mxu0 %v1009
    %1058 = vmatprep.subr.mxu0 0.0
    %1059 = vmatpush1.msra.mxu0 %v1011
    %1060 = vmatprep.subr.mxu0 0.0
    %1061 = vmatpush1.msra.mxu0 %v1013
    %1062 = vmatprep.subr.mxu0 0.0
    %1063 = vmatpush1.msra.mxu0 %v1015
    %1064 = vmatprep.subr.mxu0 0.0
    %1065 = vmatpush1.msra.mxu0 %v1017
    %1066 = vmatprep.subr.mxu0 0.0
    %1067 = vmatpush1.msra.mxu0 %v1019
    %1068 = vmatprep.subr.mxu0 0.0
    %1069 = vmatpush1.msra.mxu0 %v1021
    %1070 = vmatprep.subr.mxu0 0.0
    %1071 = vmatpush1.msra.mxu0 %v1023
    %1072 = vmatprep.subr.mxu0 0.0
    %1073 = vmatpush1.msra.mxu0 %v1025
    %1074 = vmatprep.subr.mxu0 0.0
    %1075 = vmatpush1.msra.mxu0 0.0
    %1076 = vmatprep.subr.mxu0 0.0
    %1077 = vmatpush1.msra.mxu0 0.0
    %1078 = vmatprep.subr.mxu0 0.0
    %1079 = vmatpush1.msra.mxu0 0.0
    %1080 = vmatprep.subr.mxu0 0.0
    %1081 = vmatpush1.msra.mxu0 0.0
    %1082 = vmatprep.subr.mxu0 0.0
    %1083 = vmatpush1.msra.mxu0 0.0
    %1084 = vmatprep.subr.mxu0 0.0
    %1085 = vmatpush1.msra.mxu0 0.0
    %1086 = vmatprep.subr.mxu0 0.0
    %1087 = vmatpush1.msra.mxu0 0.0
    %1088 = vmatprep.subr.mxu0 0.0
    %1089 = vmatpush1.msra.mxu0 0.0
    %1090 = vmatprep.subr.mxu0 0.0
    %1091 = vmatpush1.msra.mxu0 0.0
    %1092 = vmatprep.subr.mxu0 0.0
    %1093 = vmatpush1.msra.mxu0 0.0
    %1094 = vmatprep.subr.mxu0 0.0
    %1095 = vmatpush1.msra.mxu0 0.0
    %1096 = vmatprep.subr.mxu0 0.0
    %1097 = vmatpush1.msra.mxu0 0.0
    %1098 = vmatprep.subr.mxu0 0.0
    %1099 = vmatpush1.msra.mxu0 0.0
    %1100 = vmatprep.subr.mxu0 0.0
    %1101 = vmatpush1.msra.mxu0 0.0
    %1102 = vmatprep.subr.mxu0 0.0
    %1103 = vmatpush1.msra.mxu0 0.0
    %1104 = vmatprep.subr.mxu0 0.0
    %1105 = vmatpush1.msra.mxu0 0.0
    %1106 = vmatprep.mubr.f32.mxu0 0.0
    %1107 = vmatmul.mubr.f32.gmra.mrb[0].mxu0 %v993
    %v1108 = vpop.f32.mrb[0].mxu0
    %v1109 = vadd.f32 0.0, %v1108
    %v1110 = vpop.f32.mrb[0].mxu0
    %1111 = vdwg.mxu0
    %v1112 = vadd.f32 %v889, %v1109
    %v1113 = vld [vmem:[#allocation7 + $0xb] sm:$0x1]
    %v1114 = vlaneseq
    %v1115 = vshrl.u32 %v1114, 7
    %v1116 = vsub.s32 0, %v1115
    %v1117 = vrot.slane %v1113, %v1116
    %v1118 = vadd.f32 %v1112, %v1117
    %v1119 = vsel %vm135, %v1118, 0.0
    %1120 = vadd.xlane.f32.xlu0 %v1119
    %v1121 = vpop.xlane.xlu0 %1120
    %v1122 = vmul.f32 %v1121, %v139
    %v1123 = vsub.f32 %v1118, %v1122
    %v1124 = vmul.f32 %v1123, %v1123
    %v1125 = vsel %vm135, %v1124, 0.0
    %1126 = vadd.xlane.f32.xlu0 %v1125
    %v1127 = vpop.xlane.xlu0 %1126
    %v1128 = vmul.f32 %v1127, %v139
    %v1129 = vadd.f32 %v1128, 1e-05
    %v1130 = vrsqrt.pop %v1129
    %v1131 = vmul.f32 %v1123, %v1130
    %1132 = vrot.lane.b32.xlu0 %v150, 32
    %v1133 = vpop.permute.xlu0 %1132
    %1134 = vrot.lane.b32.xlu0 %v151, 32
    %v1135 = vpop.permute.xlu0 %1134
    %1136 = vrot.lane.b32.xlu0 %v152, 32
    %v1137 = vpop.permute.xlu0 %1136
    %1138 = vrot.lane.b32.xlu0 %v153, 32
    %v1139 = vpop.permute.xlu0 %1138
    %v1145 = vsel %vm135, %v1131, 0
    %1147 = vmatprep.subr.mxu0 0.0
    %1148 = vmatpush1.msra.mxu0 %v1133
    %1149 = vmatprep.subr.mxu0 0.0
    %1150 = vmatpush1.msra.mxu0 %v1135
    %1151 = vmatprep.subr.mxu0 0.0
    %1152 = vmatpush1.msra.mxu0 %v1137
    %1153 = vmatprep.subr.mxu0 0.0
    %1154 = vmatpush1.msra.mxu0 %v1139
    %1155 = vmatprep.subr.mxu0 0.0
    %1156 = vmatpush1.msra.mxu0 0.0
    %1157 = vmatprep.subr.mxu0 0.0
    %1158 = vmatpush1.msra.mxu0 0.0
    %1159 = vmatprep.subr.mxu0 0.0
    %1160 = vmatpush1.msra.mxu0 0.0
    %1161 = vmatprep.subr.mxu0 0.0
    %1162 = vmatpush1.msra.mxu0 0.0
    %1163 = vmatprep.subr.mxu0 0.0
    %1164 = vmatpush1.msra.mxu0 0.0
    %1165 = vmatprep.subr.mxu0 0.0
    %1166 = vmatpush1.msra.mxu0 0.0
    %1167 = vmatprep.subr.mxu0 0.0
    %1168 = vmatpush1.msra.mxu0 0.0
    %1169 = vmatprep.subr.mxu0 0.0
    %1170 = vmatpush1.msra.mxu0 0.0
    %1171 = vmatprep.subr.mxu0 0.0
    %1172 = vmatpush1.msra.mxu0 0.0
    %1173 = vmatprep.subr.mxu0 0.0
    %1174 = vmatpush1.msra.mxu0 0.0
    %1175 = vmatprep.subr.mxu0 0.0
    %1176 = vmatpush1.msra.mxu0 0.0
    %1177 = vmatprep.subr.mxu0 0.0
    %1178 = vmatpush1.msra.mxu0 0.0
    %1179 = vmatprep.subr.mxu0 0.0
    %1180 = vmatpush1.msra.mxu0 0.0
    %1181 = vmatprep.subr.mxu0 0.0
    %1182 = vmatpush1.msra.mxu0 0.0
    %1183 = vmatprep.subr.mxu0 0.0
    %1184 = vmatpush1.msra.mxu0 0.0
    %1185 = vmatprep.subr.mxu0 0.0
    %1186 = vmatpush1.msra.mxu0 0.0
    %1187 = vmatprep.subr.mxu0 0.0
    %1188 = vmatpush1.msra.mxu0 0.0
    %1189 = vmatprep.subr.mxu0 0.0
    %1190 = vmatpush1.msra.mxu0 0.0
    %1191 = vmatprep.subr.mxu0 0.0
    %1192 = vmatpush1.msra.mxu0 0.0
    %1193 = vmatprep.subr.mxu0 0.0
    %1194 = vmatpush1.msra.mxu0 0.0
    %1195 = vmatprep.subr.mxu0 0.0
    %1196 = vmatpush1.msra.mxu0 0.0
    %1197 = vmatprep.subr.mxu0 0.0
    %1198 = vmatpush1.msra.mxu0 0.0
    %1199 = vmatprep.subr.mxu0 0.0
    %1200 = vmatpush1.msra.mxu0 0.0
    %1201 = vmatprep.subr.mxu0 0.0
    %1202 = vmatpush1.msra.mxu0 0.0
    %1203 = vmatprep.subr.mxu0 0.0
    %1204 = vmatpush1.msra.mxu0 0.0
    %1205 = vmatprep.subr.mxu0 0.0
    %1206 = vmatpush1.msra.mxu0 0.0
    %1207 = vmatprep.subr.mxu0 0.0
    %1208 = vmatpush1.msra.mxu0 0.0
    %1209 = vmatprep.subr.mxu0 0.0
    %1210 = vmatpush1.msra.mxu0 0.0
    %1211 = vmatprep.mubr.f32.mxu0 0.0
    %1212 = vmatmul.mubr.f32.gmra.mrb[0].mxu0 %v1145
    %v1213 = vpop.f32.mrb[0].mxu0
    %v1214 = vadd.f32 0.0, %v1213
    %v1215 = vpop.f32.mrb[0].mxu0
    %1216 = vdwg.mxu0
    %v1217 = vadd.f32 %v1118, %v1214
    %v1218 = vld [vmem:[#allocation7 + $0x4] sm:$0x1]
    %v1219 = vlaneseq
    %v1220 = vshrl.u32 %v1219, 7
    %v1221 = vsub.s32 0, %v1220
    %v1222 = vrot.slane %v1218, %v1221
    %v1223 = vadd.f32 %v1217, %v1222
    %v1224 = vsel %vm135, %v1223, 0.0
    %1225 = vadd.xlane.f32.xlu0 %v1224
    %v1226 = vpop.xlane.xlu0 %1225
    %v1227 = vmul.f32 %v1226, %v139
    %v1228 = vsub.f32 %v1223, %v1227
    %v1229 = vmul.f32 %v1228, %v1228
    %v1230 = vsel %vm135, %v1229, 0.0
    %1231 = vadd.xlane.f32.xlu0 %v1230
    %v1232 = vpop.xlane.xlu0 %1231
    %v1233 = vmul.f32 %v1232, %v139
    %v1234 = vadd.f32 %v1233, 1e-05
    %v1235 = vrsqrt.pop %v1234
    %v1236 = vmul.f32 %v1228, %v1235
    %v1237 = vld [vmem:[#allocation5 + $0x88] sm:$0xff]
    %v1238 = vld [vmem:[#allocation5 + $0x90] sm:$0xff]
    %v1239 = vld [vmem:[#allocation5 + $0x98] sm:$0xff]
    %v1240 = vld [vmem:[#allocation5 + $0xa0] sm:$0xff]
    %v1241 = vld [vmem:[#allocation7 + $0x8] sm:$0x1]
    %v1242 = vlaneseq
    %v1243 = vshrl.u32 %v1242, 7
    %v1244 = vsub.s32 0, %v1243
    %v1245 = vrot.slane %v1241, %v1244
    %v1247 = vsel %vm135, %v1236, 0
    %1249 = vmatprep.subr.mxu0 0.0
    %1250 = vmatpush1.msra.mxu0 %v1237
    %1251 = vmatprep.subr.mxu0 0.0
    %1252 = vmatpush1.msra.mxu0 %v1238
    %1253 = vmatprep.subr.mxu0 0.0
    %1254 = vmatpush1.msra.mxu0 %v1239
    %1255 = vmatprep.subr.mxu0 0.0
    %1256 = vmatpush1.msra.mxu0 %v1240
    %1257 = vmatprep.subr.mxu0 0.0
    %1258 = vmatpush1.msra.mxu0 0.0
    %1259 = vmatprep.subr.mxu0 0.0
    %1260 = vmatpush1.msra.mxu0 0.0
    %1261 = vmatprep.subr.mxu0 0.0
    %1262 = vmatpush1.msra.mxu0 0.0
    %1263 = vmatprep.subr.mxu0 0.0
    %1264 = vmatpush1.msra.mxu0 0.0
    %1265 = vmatprep.subr.mxu0 0.0
    %1266 = vmatpush1.msra.mxu0 0.0
    %1267 = vmatprep.subr.mxu0 0.0
    %1268 = vmatpush1.msra.mxu0 0.0
    %1269 = vmatprep.subr.mxu0 0.0
    %1270 = vmatpush1.msra.mxu0 0.0
    %1271 = vmatprep.subr.mxu0 0.0
    %1272 = vmatpush1.msra.mxu0 0.0
    %1273 = vmatprep.subr.mxu0 0.0
    %1274 = vmatpush1.msra.mxu0 0.0
    %1275 = vmatprep.subr.mxu0 0.0
    %1276 = vmatpush1.msra.mxu0 0.0
    %1277 = vmatprep.subr.mxu0 0.0
    %1278 = vmatpush1.msra.mxu0 0.0
    %1279 = vmatprep.subr.mxu0 0.0
    %1280 = vmatpush1.msra.mxu0 0.0
    %1281 = vmatprep.subr.mxu0 0.0
    %1282 = vmatpush1.msra.mxu0 0.0
    %1283 = vmatprep.subr.mxu0 0.0
    %1284 = vmatpush1.msra.mxu0 0.0
    %1285 = vmatprep.subr.mxu0 0.0
    %1286 = vmatpush1.msra.mxu0 0.0
    %1287 = vmatprep.subr.mxu0 0.0
    %1288 = vmatpush1.msra.mxu0 0.0
    %1289 = vmatprep.subr.mxu0 0.0
    %1290 = vmatpush1.msra.mxu0 0.0
    %1291 = vmatprep.subr.mxu0 0.0
    %1292 = vmatpush1.msra.mxu0 0.0
    %1293 = vmatprep.subr.mxu0 0.0
    %1294 = vmatpush1.msra.mxu0 0.0
    %1295 = vmatprep.subr.mxu0 0.0
    %1296 = vmatpush1.msra.mxu0 0.0
    %1297 = vmatprep.subr.mxu0 0.0
    %1298 = vmatpush1.msra.mxu0 0.0
    %1299 = vmatprep.subr.mxu0 0.0
    %1300 = vmatpush1.msra.mxu0 0.0
    %1301 = vmatprep.subr.mxu0 0.0
    %1302 = vmatpush1.msra.mxu0 0.0
    %1303 = vmatprep.subr.mxu0 0.0
    %1304 = vmatpush1.msra.mxu0 0.0
    %1305 = vmatprep.subr.mxu0 0.0
    %1306 = vmatpush1.msra.mxu0 0.0
    %1307 = vmatprep.subr.mxu0 0.0
    %1308 = vmatpush1.msra.mxu0 0.0
    %1309 = vmatprep.subr.mxu0 0.0
    %1310 = vmatpush1.msra.mxu0 0.0
    %1311 = vmatprep.subr.mxu0 0.0
    %1312 = vmatpush1.msra.mxu0 0.0
    %1313 = vmatprep.mubr.f32.mxu0 0.0
    %1314 = vmatmul.mubr.f32.gmra.mrb[0].mxu0 %v1247
    %v1315 = vpop.f32.mrb[0].mxu0
    %v1316 = vadd.f32 %v1245, %v1315
    %v1317 = vpop.f32.mrb[0].mxu0
    %1318 = vdwg.mxu0
    %v1319 = vmul.f32 %v1316, 0.5
    %v1320 = vmul.f32 %v1316, %v1316
    %v1321 = vmul.f32 %v1316, %v1320
    %v1322 = vmul.f32 %v1321, 0.044715
    %v1323 = vadd.f32 %v1316, %v1322
    %v1324 = vmul.f32 %v1323, 0.7978846
    %v1325 = vtanh.pop %v1324
    %v1326 = vadd.f32 %v1325, 1.0
    %v1327 = vmul.f32 %v1319, %v1326
    %1328 = vrot.lane.b32.xlu0 %v338, 32
    %v1329 = vpop.permute.xlu0 %1328
    %1330 = vrot.lane.b32.xlu0 %v339, 32
    %v1331 = vpop.permute.xlu0 %1330
    %1332 = vrot.lane.b32.xlu0 %v340, 32
    %v1333 = vpop.permute.xlu0 %1332
    %1334 = vrot.lane.b32.xlu0 %v341, 32
    %v1335 = vpop.permute.xlu0 %1334
    %1336 = vrot.lane.b32.xlu0 %v342, 32
    %v1337 = vpop.permute.xlu0 %1336
    %1338 = vrot.lane.b32.xlu0 %v343, 32
    %v1339 = vpop.permute.xlu0 %1338
    %1340 = vrot.lane.b32.xlu0 %v344, 32
    %v1341 = vpop.permute.xlu0 %1340
    %1342 = vrot.lane.b32.xlu0 %v345, 32
    %v1343 = vpop.permute.xlu0 %1342
    %1344 = vrot.lane.b32.xlu0 %v346, 32
    %v1345 = vpop.permute.xlu0 %1344
    %1346 = vrot.lane.b32.xlu0 %v347, 32
    %v1347 = vpop.permute.xlu0 %1346
    %1348 = vrot.lane.b32.xlu0 %v348, 32
    %v1349 = vpop.permute.xlu0 %1348
    %1350 = vrot.lane.b32.xlu0 %v349, 32
    %v1351 = vpop.permute.xlu0 %1350
    %1352 = vrot.lane.b32.xlu0 %v350, 32
    %v1353 = vpop.permute.xlu0 %1352
    %1354 = vrot.lane.b32.xlu0 %v351, 32
    %v1355 = vpop.permute.xlu0 %1354
    %1356 = vrot.lane.b32.xlu0 %v352, 32
    %v1357 = vpop.permute.xlu0 %1356
    %1358 = vrot.lane.b32.xlu0 %v353, 32
    %v1359 = vpop.permute.xlu0 %1358
    %1376 = vmatprep.subr.mxu0 0.0
    %1377 = vmatpush1.msra.mxu0 %v1329
    %1378 = vmatprep.subr.mxu0 0.0
    %1379 = vmatpush1.msra.mxu0 %v1331
    %1380 = vmatprep.subr.mxu0 0.0
    %1381 = vmatpush1.msra.mxu0 %v1333
    %1382 = vmatprep.subr.mxu0 0.0
    %1383 = vmatpush1.msra.mxu0 %v1335
    %1384 = vmatprep.subr.mxu0 0.0
    %1385 = vmatpush1.msra.mxu0 %v1337
    %1386 = vmatprep.subr.mxu0 0.0
    %1387 = vmatpush1.msra.mxu0 %v1339
    %1388 = vmatprep.subr.mxu0 0.0
    %1389 = vmatpush1.msra.mxu0 %v1341
    %1390 = vmatprep.subr.mxu0 0.0
    %1391 = vmatpush1.msra.mxu0 %v1343
    %1392 = vmatprep.subr.mxu0 0.0
    %1393 = vmatpush1.msra.mxu0 %v1345
    %1394 = vmatprep.subr.mxu0 0.0
    %1395 = vmatpush1.msra.mxu0 %v1347
    %1396 = vmatprep.subr.mxu0 0.0
    %1397 = vmatpush1.msra.mxu0 %v1349
    %1398 = vmatprep.subr.mxu0 0.0
    %1399 = vmatpush1.msra.mxu0 %v1351
    %1400 = vmatprep.subr.mxu0 0.0
    %1401 = vmatpush1.msra.mxu0 %v1353
    %1402 = vmatprep.subr.mxu0 0.0
    %1403 = vmatpush1.msra.mxu0 %v1355
    %1404 = vmatprep.subr.mxu0 0.0
    %1405 = vmatpush1.msra.mxu0 %v1357
    %1406 = vmatprep.subr.mxu0 0.0
    %1407 = vmatpush1.msra.mxu0 %v1359
    %1408 = vmatprep.subr.mxu0 0.0
    %1409 = vmatpush1.msra.mxu0 0.0
    %1410 = vmatprep.subr.mxu0 0.0
    %1411 = vmatpush1.msra.mxu0 0.0
    %1412 = vmatprep.subr.mxu0 0.0
    %1413 = vmatpush1.msra.mxu0 0.0
    %1414 = vmatprep.subr.mxu0 0.0
    %1415 = vmatpush1.msra.mxu0 0.0
    %1416 = vmatprep.subr.mxu0 0.0
    %1417 = vmatpush1.msra.mxu0 0.0
    %1418 = vmatprep.subr.mxu0 0.0
    %1419 = vmatpush1.msra.mxu0 0.0
    %1420 = vmatprep.subr.mxu0 0.0
    %1421 = vmatpush1.msra.mxu0 0.0
    %1422 = vmatprep.subr.mxu0 0.0
    %1423 = vmatpush1.msra.mxu0 0.0
    %1424 = vmatprep.subr.mxu0 0.0
    %1425 = vmatpush1.msra.mxu0 0.0
    %1426 = vmatprep.subr.mxu0 0.0
    %1427 = vmatpush1.msra.mxu0 0.0
    %1428 = vmatprep.subr.mxu0 0.0
    %1429 = vmatpush1.msra.mxu0 0.0
    %1430 = vmatprep.subr.mxu0 0.0
    %1431 = vmatpush1.msra.mxu0 0.0
    %1432 = vmatprep.subr.mxu0 0.0
    %1433 = vmatpush1.msra.mxu0 0.0
    %1434 = vmatprep.subr.mxu0 0.0
    %1435 = vmatpush1.msra.mxu0 0.0
    %1436 = vmatprep.subr.mxu0 0.0
    %1437 = vmatpush1.msra.mxu0 0.0
    %1438 = vmatprep.subr.mxu0 0.0
    %1439 = vmatpush1.msra.mxu0 0.0
    %1440 = vmatprep.mubr.f32.mxu0 0.0
    %1441 = vmatmul.mubr.f32.gmra.mrb[0].mxu0 %v1327
    %v1442 = vpop.f32.mrb[0].mxu0
    %v1443 = vadd.f32 0.0, %v1442
    %v1444 = vpop.f32.mrb[0].mxu0
    %1445 = vdwg.mxu0
    %v1446 = vadd.f32 %v1223, %v1443
    %v1447 = vld [vmem:[#allocation7 + $0xc] sm:$0x1]
    %v1448 = vlaneseq
    %v1449 = vshrl.u32 %v1448, 7
    %v1450 = vsub.s32 0, %v1449
    %v1451 = vrot.slane %v1447, %v1450
    %v1452 = vadd.f32 %v1446, %v1451
    %v1453 = vsel %vm135, %v1452, 0.0
    %1454 = vadd.xlane.f32.xlu0 %v1453
    %v1455 = vpop.xlane.xlu0 %1454
    %v1456 = vmul.f32 %v1455, %v139
    %v1457 = vsub.f32 %v1452, %v1456
    %v1458 = vmul.f32 %v1457, %v1457
    %v1459 = vsel %vm135, %v1458, 0.0
    %1460 = vadd.xlane.f32.xlu0 %v1459
    %v1461 = vpop.xlane.xlu0 %1460
    %v1462 = vmul.f32 %v1461, %v139
    %v1463 = vadd.f32 %v1462, 1e-05
    %v1464 = vrsqrt.pop %v1463
    %v1465 = vmul.f32 %v1457, %v1464
    %v1466 = vld [vmem:[#allocation5 + $0x128] sm:$0xff]
    %v1467 = vld [vmem:[#allocation5 + $0x130] sm:$0xff]
    %v1468 = vld [vmem:[#allocation5 + $0x138] sm:$0xff]
    %v1469 = vld [vmem:[#allocation5 + $0x140] sm:$0xff]
    %v1470 = vld [vmem:[#allocation7 + $0xd] sm:$0x1]
    %v1471 = vlaneseq
    %v1472 = vshrl.u32 %v1471, 7
    %v1473 = vsub.s32 0, %v1472
    %v1474 = vrot.slane %v1470, %v1473
    %v1476 = vsel %vm135, %v1465, 0
    %1478 = vmatprep.subr.mxu0 0.0
    %1479 = vmatpush1.msra.mxu0 %v1466
    %1480 = vmatprep.subr.mxu0 0.0
    %1481 = vmatpush1.msra.mxu0 %v1467
    %1482 = vmatprep.subr.mxu0 0.0
    %1483 = vmatpush1.msra.mxu0 %v1468
    %1484 = vmatprep.subr.mxu0 0.0
    %1485 = vmatpush1.msra.mxu0 %v1469
    %1486 = vmatprep.subr.mxu0 0.0
    %1487 = vmatpush1.msra.mxu0 0.0
    %1488 = vmatprep.subr.mxu0 0.0
    %1489 = vmatpush1.msra.mxu0 0.0
    %1490 = vmatprep.subr.mxu0 0.0
    %1491 = vmatpush1.msra.mxu0 0.0
    %1492 = vmatprep.subr.mxu0 0.0
    %1493 = vmatpush1.msra.mxu0 0.0
    %1494 = vmatprep.subr.mxu0 0.0
    %1495 = vmatpush1.msra.mxu0 0.0
    %1496 = vmatprep.subr.mxu0 0.0
    %1497 = vmatpush1.msra.mxu0 0.0
    %1498 = vmatprep.subr.mxu0 0.0
    %1499 = vmatpush1.msra.mxu0 0.0
    %1500 = vmatprep.subr.mxu0 0.0
    %1501 = vmatpush1.msra.mxu0 0.0
    %1502 = vmatprep.subr.mxu0 0.0
    %1503 = vmatpush1.msra.mxu0 0.0
    %1504 = vmatprep.subr.mxu0 0.0
    %1505 = vmatpush1.msra.mxu0 0.0
    %1506 = vmatprep.subr.mxu0 0.0
    %1507 = vmatpush1.msra.mxu0 0.0
    %1508 = vmatprep.subr.mxu0 0.0
    %1509 = vmatpush1.msra.mxu0 0.0
    %1510 = vmatprep.subr.mxu0 0.0
    %1511 = vmatpush1.msra.mxu0 0.0
    %1512 = vmatprep.subr.mxu0 0.0
    %1513 = vmatpush1.msra.mxu0 0.0
    %1514 = vmatprep.subr.mxu0 0.0
    %1515 = vmatpush1.msra.mxu0 0.0
    %1516 = vmatprep.subr.mxu0 0.0
    %1517 = vmatpush1.msra.mxu0 0.0
    %1518 = vmatprep.subr.mxu0 0.0
    %1519 = vmatpush1.msra.mxu0 0.0
    %1520 = vmatprep.subr.mxu0 0.0
    %1521 = vmatpush1.msra.mxu0 0.0
    %1522 = vmatprep.subr.mxu0 0.0
    %1523 = vmatpush1.msra.mxu0 0.0
    %1524 = vmatprep.subr.mxu0 0.0
    %1525 = vmatpush1.msra.mxu0 0.0
    %1526 = vmatprep.subr.mxu0 0.0
    %1527 = vmatpush1.msra.mxu0 0.0
    %1528 = vmatprep.subr.mxu0 0.0
    %1529 = vmatpush1.msra.mxu0 0.0
    %1530 = vmatprep.subr.mxu0 0.0
    %1531 = vmatpush1.msra.mxu0 0.0
    %1532 = vmatprep.subr.mxu0 0.0
    %1533 = vmatpush1.msra.mxu0 0.0
    %1534 = vmatprep.subr.mxu0 0.0
    %1535 = vmatpush1.msra.mxu0 0.0
    %1536 = vmatprep.subr.mxu0 0.0
    %1537 = vmatpush1.msra.mxu0 0.0
    %1538 = vmatprep.subr.mxu0 0.0
    %1539 = vmatpush1.msra.mxu0 0.0
    %1540 = vmatprep.subr.mxu0 0.0
    %1541 = vmatpush1.msra.mxu0 0.0
    %1542 = vmatprep.mubr.f32.mxu0 0.0
    %1543 = vmatmul.mubr.f32.gmra.mrb[0].mxu0 %v1476
    %v1544 = vpop.f32.mrb[0].mxu0
    %v1545 = vadd.f32 %v1474, %v1544
    %v1546 = vpop.f32.mrb[0].mxu0
    %1547 = vdwg.mxu0
    %v1548 = vmax.f32 %v1545, 0.0
    %1549 = vst [vmem:[#allocation8] sm:$0xff] %v1548
    // Predicated region
    $region26: #{tpu_custom_call.1} parent=1 // pred_check
      _
    $region27: #{tpu_custom_call.1} parent=1 // pred_check_branch
      %1551 = sbr.rel (0) target = $region29
    $region28: #{tpu_custom_call.1} parent=1 // pred_region
      %s1553 = ssub.s32 128, 128
      %1554 = vsyncadd [#allocation4], %s1553
      %s1556 = sshll.u32 [#allocation8], 4
      %s1557 = int_to_ptr.vmem [resolvable:$true] %s1556
      %1559 = dma.vmem_to_hbm [thread:$0]  %s1557, 128, %s3, [#allocation4]
    $region29: #{tpu_custom_call.1} parent=1 // pred_fallthru
      _
    // Predicated region
    $region30: #{tpu_custom_call.1} parent=1 // pred_check
      _
    $region31: #{tpu_custom_call.1} parent=1 // pred_check_branch
      %1561 = sbr.rel (0) target = $region33
    $region32: #{tpu_custom_call.1} parent=1 // pred_region
      %1562 = dma.done [#allocation4], 128
    $region33: #{tpu_custom_call.1} parent=1 // pred_fallthru
      _
    %1563 = vsyncpa [#allocation3], 1
    %1564 = vsyncpa [#allocation6], 1
    %1565 = vsyncpa [#allocation4], 1

</llo_original>
